<compile_context>
chip_gen: v5e
topology: v5e:2x2
jax: 0.10.0
libtpu: 0.0.40
codegen_flags: <defaults>
</compile_context>

<pallas_src>
import math
from functools import partial

import jax
import jax.numpy as jnp
from jax.experimental import pallas as pl
from jax.experimental.pallas import tpu as pltpu


def _round_up(x, m):
    return (x + m - 1) // m * m


def _tpu_hw_info():
    """(VMEM capacity bytes, # TensorCores sharing the grid), with safe fallbacks."""
    vmem_cap = 64 << 20          # conservative default: v7x per-core VMEM
    cores = 1
    try:
        info = pltpu.get_tpu_info()
        cap = getattr(info, "vmem_capacity_bytes", None)
        if cap:
            vmem_cap = int(cap)
        for attr in ("num_cores", "num_tensorcores", "tensorcore_count", "core_count"):
            v = getattr(info, attr, None)
            if isinstance(v, int) and v > 0:
                cores = v
                break
    except Exception:
        pass
    try:
        v = getattr(jax.devices()[0], "num_cores", None)
        if isinstance(v, int) and v > 0:
            cores = max(cores, v)
    except Exception:
        pass
    return vmem_cap, cores


def s2a_pool_kernel(x_ref, wq_ref, bq_ref, wk_ref, bk_ref, wv_ref, bv_ref,
                    wo_ref, bo_ref, hsel_ref, hselt_ref, o_ref, *, approx_recip):
    M, tS, Ep = x_ref.shape
    Dp = wq_ref.shape[1]
    H = hsel_ref.shape[1]
    cd = x_ref.dtype
    f32 = jnp.float32

    x3 = x_ref[...]                                       # [M, tS, Ep] compute dtype
    xf = x3.reshape(M * tS, Ep)                           # layout-preserving (tS % 8 == 0)

    # Fused (outer proj o MHA in-proj) K/V projections; compute-dtype MXU, f32 accumulate.
    k = (jnp.dot(xf, wk_ref[...], preferred_element_type=f32) + bk_ref[...]).astype(cd)
    v = (jnp.dot(xf, wv_ref[...], preferred_element_type=f32) + bv_ref[...]).astype(cd)
    k3 = k.reshape(M, tS, Dp)                             # [M, tS, Dp]
    v3 = v.reshape(M, tS, Dp)

    # Query path: sum over masks (leading axis); 1/M and 1/sqrt(head_dim) folded into wq/bq.
    qs = jnp.sum(x3, axis=0)                              # [tS, Ep]
    q = (jnp.dot(qs, wq_ref[...], preferred_element_type=f32) + bq_ref[...]).astype(cd)

    # Head-batched scores: per-lane q*k products, within-head lane reduction on the MXU
    # via the one-hot head selector hsel [Dp, H] (all MXU inputs in compute dtype).
    prod = (q[None, :, :] * k3).reshape(M * tS, Dp)
    scores = jnp.dot(prod, hsel_ref[...], preferred_element_type=f32)
    scores = scores.reshape(M, tS, H)                     # [M, tS, H] f32

    # Softmax over the masks axis (leading, untiled -> cheap cross-vreg reductions).
    s_max = jnp.max(scores, axis=0, keepdims=True)
    p = jnp.exp(scores - s_max)
    denom = jnp.sum(p, axis=0, keepdims=True)
    if approx_recip:
        p = p * pl.reciprocal(denom, approx=True)         # EUP slot, ~free (bf16 path)
    else:
        p = p / denom                                     # exact on the f32 path

    # Broadcast each head's weight back over its lanes (MXU) and combine values (f32 acc).
    p_full = jnp.dot(p.reshape(M * tS, H).astype(cd), hselt_ref[...],
                     preferred_element_type=f32).reshape(M, tS, Dp)
    attn = jnp.sum(p_full * v3, axis=0)                   # [tS, Dp] f32

    # MHA out_proj.
    out = jnp.dot(attn.astype(cd), wo_ref[...], preferred_element_type=f32) + bo_ref[...]
    o_ref[...] = out.astype(o_ref.dtype)


def semantic_attention_pooling(mask_embeddings, params, *, n_heads=8, block_s=None,
                               compute_dtype=jnp.bfloat16, out_dtype=jnp.float32):
    """mask_embeddings: [Num_Masks, Vis_seq_len, embed_dim] -> [Vis_seq_len, output_dim]."""
    M, S, E = mask_embeddings.shape
    D = params["wq"].shape[0]
    assert D % n_heads == 0
    d = D // n_heads
    f32 = jnp.float32

    # Hardware-aligned sizes: embed/out dims -> lanes (128). Masks stay on the leading axis.
    Ep = _round_up(E, 128)
    Dp = _round_up(D, 128)

    # ---- one-time plain-JAX glue: fuse / transpose / pad weights ----
    scale = 1.0 / math.sqrt(d)
    wq_f = (params["wqi"].astype(f32) @ params["wq"].astype(f32)).T * (scale / M)
    bq_f = (params["wqi"].astype(f32) @ params["bq"].astype(f32)
            + params["bqi"].astype(f32)) * scale
    wk_f = (params["wki"].astype(f32) @ params["wk"].astype(f32)).T
    bk_f = params["wki"].astype(f32) @ params["bk"].astype(f32) + params["bki"].astype(f32)
    wv_f = (params["wvi"].astype(f32) @ params["wv"].astype(f32)).T
    bv_f = params["wvi"].astype(f32) @ params["bv"].astype(f32) + params["bvi"].astype(f32)
    wo_t = params["wo"].astype(f32).T
    bo = params["bo"].astype(f32)

    pad_w = lambda w, r, c: jnp.pad(w, ((0, r - w.shape[0]), (0, c - w.shape[1])))
    pad_b = lambda b: jnp.pad(b, (0, Dp - D)).reshape(1, Dp).astype(f32)   # biases stay f32

    wq_f = pad_w(wq_f, Ep, Dp).astype(compute_dtype)
    wk_f = pad_w(wk_f, Ep, Dp).astype(compute_dtype)
    wv_f = pad_w(wv_f, Ep, Dp).astype(compute_dtype)
    wo_t = pad_w(wo_t, Dp, Dp).astype(compute_dtype)
    bq_f, bk_f, bv_f, bo = pad_b(bq_f), pad_b(bk_f), pad_b(bv_f), pad_b(bo)

    # One-hot head selector: lane j belongs to head j // d (zero on padded lanes).
    lane = jnp.arange(Dp)
    hsel = ((lane[:, None] // d == jnp.arange(n_heads)[None, :]) &
            (lane[:, None] < D)).astype(compute_dtype)                    # [Dp, H]
    hselt = hsel.T                                                         # [H, Dp]

    # ---- generation-aware tile-size / VMEM budgeting ----
    vmem_cap, n_cores = _tpu_hw_info()
    budget = max(int(vmem_cap * 3 // 4), 24 << 20)   # ~96 MiB on v5e/v6e, ~48 MiB on v7x
    isz = jnp.dtype(compute_dtype).itemsize
    oisz = jnp.dtype(out_dtype).itemsize

    def est_vmem(bs, weight_bufs):
        x_io = 2 * M * bs * Ep * isz                 # double-buffered input tile
        o_io = 2 * bs * Dp * oisz                    # double-buffered output tile
        w_bytes = (3 * Ep * Dp + Dp * Dp + 2 * n_heads * Dp) * isz + 4 * Dp * 4
        live = (M * bs * Dp * (3 * isz + 2 * 4)      # k3/v3/prod (cd) + p_full & product (f32)
                + M * bs * n_heads * 2 * 4           # scores / p
                + bs * (Ep * isz + 3 * Dp * 4))      # qs / q / attn / out rows
        return x_io + o_io + weight_bufs * w_bytes + live

    if block_s is None:
        s_cap = _round_up(S, 8)
        cands = [c for c in (2048, 1024, 512, 256, 128, 64, 32, 16, 8) if c <= s_cap] or [8]
        fitting = [c for c in cands if est_vmem(c, 1) <= budget] or [cands[-1]]

        def rank(c):
            steps = -(-S // c)
            pad_frac = (steps * c - S) / max(S, 1)
            unbalanced = (n_cores > 1) and (steps % n_cores != 0)
            # prefer: low padding waste, megacore-balanced step count, few steps, big tile
            return (pad_frac > 0.0625, unbalanced, steps, -c)

        block_s = min(fitting, key=rank)
    block_s = max(8, _round_up(block_s, 8))
    Sp = _round_up(S, block_s)
    grid = (Sp // block_s,)

    # x kept in native [M, S, E] layout: single cast (to compute_dtype) + pad pass, no transpose.
    x = mask_embeddings.astype(compute_dtype)
    if Sp != S or Ep != E:
        x = jnp.pad(x, ((0, 0), (0, Sp - S), (0, Ep - E)))

    kernel = partial(s2a_pool_kernel, approx_recip=(compute_dtype != jnp.float32))

    def _run(weight_mode):
        wb = 1 if weight_mode is not None else 2
        vmem_limit = int(min(max(est_vmem(block_s, wb) + (8 << 20), 32 << 20), vmem_cap))

        def const_spec(arr):
            shp = arr.shape
            idx = lambda i: (0,) * len(shp)
            if weight_mode is not None:
                return pl.BlockSpec(shp, idx, pipeline_mode=weight_mode)
            return pl.BlockSpec(shp, idx)

        in_specs = [pl.BlockSpec((M, block_s, Ep), lambda i: (0, i, 0))] + [
            const_spec(a) for a in (wq_f, bq_f, wk_f, bk_f, wv_f, bv_f, wo_t, bo, hsel, hselt)]

        return pl.pallas_call(
            kernel,
            out_shape=jax.ShapeDtypeStruct((Sp, Dp), out_dtype),
            grid=grid,
            in_specs=in_specs,
            out_specs=pl.BlockSpec((block_s, Dp), lambda i: (i, 0)),
            compiler_params=pltpu.CompilerParams(
                dimension_semantics=("parallel",),
                vmem_limit_bytes=vmem_limit),
        )(x, wq_f, bq_f, wk_f, bk_f, wv_f, bv_f, wo_t, bo, hsel, hselt)

    try:
        # Grid-invariant weights single-buffered: halves their VMEM residency (key on v7x).
        out = _run(pl.Buffered(1))
    except Exception:
        # Fallback for JAX versions without per-spec pipeline_mode support.
        out = _run(None)

    return out[:S, :D]                                    # drop S / lane padding


def reference_jax(mask_embeddings, p, n_heads):
    x = jnp.transpose(mask_embeddings, (1, 0, 2)).astype(jnp.float32)  # [S, M, E]
    S, M, _ = x.shape
    D = p["wq"].shape[0]
    d = D // n_heads
    k = x @ p["wk"].T + p["bk"]
    v = x @ p["wv"].T + p["bv"]
    q = jnp.mean(x, axis=1, keepdims=True) @ p["wq"].T + p["bq"]       # [S, 1, D]
    q2 = q @ p["wqi"].T + p["bqi"]
    k2 = k @ p["wki"].T + p["bki"]
    v2 = v @ p["wvi"].T + p["bvi"]
    q2 = q2.reshape(S, 1, n_heads, d).transpose(0, 2, 1, 3)
    k2 = k2.reshape(S, M, n_heads, d).transpose(0, 2, 1, 3)
    v2 = v2.reshape(S, M, n_heads, d).transpose(0, 2, 1, 3)
    scores = jnp.einsum("shqd,shkd->shqk", q2, k2) / jnp.sqrt(jnp.float32(d))
    attn = jax.nn.softmax(scores, axis=-1)
    o = jnp.einsum("shqk,shkd->shqd", attn, v2)
    o = o.transpose(0, 2, 1, 3).reshape(S, 1, D)
    o = o @ p["wo"].T + p["bo"]
    return o[:, 0, :]


if __name__ == "__main__":
    # Small shapes: Num_Masks=4, Vis_seq_len=16, embed_dim=32, output_dim=32, heads=8.
    M, S, E, D, H = 4, 16, 32, 32, 8

    key = jax.random.PRNGKey(0)
    ks = jax.random.split(key, 16)
    sc = 0.05
    params = {
        "wq":  jax.random.normal(ks[0],  (D, E), jnp.float32) * sc,
        "bq":  jax.random.normal(ks[1],  (D,),   jnp.float32) * sc,
        "wk":  jax.random.normal(ks[2],  (D, E), jnp.float32) * sc,
        "bk":  jax.random.normal(ks[3],  (D,),   jnp.float32) * sc,
        "wv":  jax.random.normal(ks[4],  (D, E), jnp.float32) * sc,
        "bv":  jax.random.normal(ks[5],  (D,),   jnp.float32) * sc,
        "wqi": jax.random.normal(ks[6],  (D, D), jnp.float32) * sc,
        "bqi": jax.random.normal(ks[7],  (D,),   jnp.float32) * sc,
        "wki": jax.random.normal(ks[8],  (D, D), jnp.float32) * sc,
        "bki": jax.random.normal(ks[9],  (D,),   jnp.float32) * sc,
        "wvi": jax.random.normal(ks[10], (D, D), jnp.float32) * sc,
        "bvi": jax.random.normal(ks[11], (D,),   jnp.float32) * sc,
        "wo":  jax.random.normal(ks[12], (D, D), jnp.float32) * sc,
        "bo":  jax.random.normal(ks[13], (D,),   jnp.float32) * sc,
    }
    mask_embeddings = jax.random.normal(ks[14], (M, S, E), jnp.float32)

    ref = reference_jax(mask_embeddings, params, H)

    # f32 compute path (tolerance covers fused-projection rounding).
    out_f32 = jax.block_until_ready(
        semantic_attention_pooling(mask_embeddings, params, n_heads=H,
                                   compute_dtype=jnp.float32))
    assert out_f32.shape == (S, D), out_f32.shape
    err32 = float(jnp.max(jnp.abs(out_f32.astype(jnp.float32) - ref)))
    assert jnp.allclose(out_f32.astype(jnp.float32), ref, rtol=1e-2, atol=3e-3), err32

    # bf16 compute path (half DMA/VMEM, native bf16 MXU); looser tolerance for bf16 rounding.
    out_bf16 = jax.block_until_ready(
        semantic_attention_pooling(mask_embeddings, params, n_heads=H,
                                   compute_dtype=jnp.bfloat16))
    assert out_bf16.shape == (S, D), out_bf16.shape
    errbf = float(jnp.max(jnp.abs(out_bf16.astype(jnp.float32) - ref)))
    assert jnp.allclose(out_bf16.astype(jnp.float32), ref, rtol=1e-1, atol=3e-2), errbf

    print("KERNEL_OK")
</pallas_src>

<mosaic_0001>
module attributes {stable_mosaic.version = 11 : i64} {
  func.func @s2a_pool_kernel(%arg0: i32, %arg1: memref<4x16x128xf32, #tpu.memory_space<vmem>>, %arg2: memref<128x128xf32, #tpu.memory_space<vmem>>, %arg3: memref<1x128xf32, #tpu.memory_space<vmem>>, %arg4: memref<128x128xf32, #tpu.memory_space<vmem>>, %arg5: memref<1x128xf32, #tpu.memory_space<vmem>>, %arg6: memref<128x128xf32, #tpu.memory_space<vmem>>, %arg7: memref<1x128xf32, #tpu.memory_space<vmem>>, %arg8: memref<128x128xf32, #tpu.memory_space<vmem>>, %arg9: memref<1x128xf32, #tpu.memory_space<vmem>>, %arg10: memref<128x8xf32, #tpu.memory_space<vmem>>, %arg11: memref<8x128xf32, #tpu.memory_space<vmem>>, %arg12: memref<16x128xf32, #tpu.memory_space<vmem>>) attributes {dimension_semantics = [#tpu.dimension_semantics<parallel>], iteration_bounds = array<i64: 1>, scalar_prefetch = 0 : i64, scratch_operands = 0 : i64, tpu.core_type = #tpu.core_type<tc>, window_params = [{transform_indices = @transform_0, window_bounds = array<i64: 4, 16, 128>}, {pipeline_mode = #tpu.pipeline_mode<synchronous>, transform_indices = @transform_1, window_bounds = array<i64: 128, 128>}, {pipeline_mode = #tpu.pipeline_mode<synchronous>, transform_indices = @transform_2, window_bounds = array<i64: 1, 128>}, {pipeline_mode = #tpu.pipeline_mode<synchronous>, transform_indices = @transform_3, window_bounds = array<i64: 128, 128>}, {pipeline_mode = #tpu.pipeline_mode<synchronous>, transform_indices = @transform_4, window_bounds = array<i64: 1, 128>}, {pipeline_mode = #tpu.pipeline_mode<synchronous>, transform_indices = @transform_5, window_bounds = array<i64: 128, 128>}, {pipeline_mode = #tpu.pipeline_mode<synchronous>, transform_indices = @transform_6, window_bounds = array<i64: 1, 128>}, {pipeline_mode = #tpu.pipeline_mode<synchronous>, transform_indices = @transform_7, window_bounds = array<i64: 128, 128>}, {pipeline_mode = #tpu.pipeline_mode<synchronous>, transform_indices = @transform_8, window_bounds = array<i64: 1, 128>}, {pipeline_mode = #tpu.pipeline_mode<synchronous>, transform_indices = @transform_9, window_bounds = array<i64: 128, 8>}, {pipeline_mode = #tpu.pipeline_mode<synchronous>, transform_indices = @transform_10, window_bounds = array<i64: 8, 128>}, {transform_indices = @transform_11, window_bounds = array<i64: 16, 128>}]} {
    %c0 = arith.constant 0 : index
    %c0_0 = arith.constant 0 : index
    %c0_1 = arith.constant 0 : index
    %0 = vector.load %arg1[%c0, %c0_0, %c0_1] : memref<4x16x128xf32, #tpu.memory_space<vmem>>, vector<4x16x128xf32>
    %1 = vector.shape_cast %0 : vector<4x16x128xf32> to vector<64x128xf32>
    %c0_2 = arith.constant 0 : index
    %c0_3 = arith.constant 0 : index
    %2 = vector.load %arg4[%c0_2, %c0_3] : memref<128x128xf32, #tpu.memory_space<vmem>>, vector<128x128xf32>
    %cst = arith.constant dense<0.000000e+00> : vector<64x128xf32>
    %3 = tpu.matmul %1, %2, %cst {dimension_numbers = #tpu.dot_dimension_numbers<[1], [0], [0], [1], [0, 0, 1, 1], [], []>} : vector<64x128xf32>, vector<128x128xf32>, vector<64x128xf32> -> vector<64x128xf32>
    %c0_4 = arith.constant 0 : index
    %c0_5 = arith.constant 0 : index
    %4 = vector.load %arg5[%c0_4, %c0_5] : memref<1x128xf32, #tpu.memory_space<vmem>>, vector<1x128xf32>
    %5 = vector.broadcast %4 : vector<1x128xf32> to vector<64x128xf32>
    %6 = arith.addf %3, %5 : vector<64x128xf32>
    %c0_6 = arith.constant 0 : index
    %c0_7 = arith.constant 0 : index
    %7 = vector.load %arg6[%c0_6, %c0_7] : memref<128x128xf32, #tpu.memory_space<vmem>>, vector<128x128xf32>
    %cst_8 = arith.constant dense<0.000000e+00> : vector<64x128xf32>
    %8 = tpu.matmul %1, %7, %cst_8 {dimension_numbers = #tpu.dot_dimension_numbers<[1], [0], [0], [1], [0, 0, 1, 1], [], []>} : vector<64x128xf32>, vector<128x128xf32>, vector<64x128xf32> -> vector<64x128xf32>
    %c0_9 = arith.constant 0 : index
    %c0_10 = arith.constant 0 : index
    %9 = vector.load %arg7[%c0_9, %c0_10] : memref<1x128xf32, #tpu.memory_space<vmem>>, vector<1x128xf32>
    %10 = vector.broadcast %9 : vector<1x128xf32> to vector<64x128xf32>
    %11 = arith.addf %8, %10 : vector<64x128xf32>
    %12 = vector.shape_cast %6 : vector<64x128xf32> to vector<4x16x128xf32>
    %13 = vector.shape_cast %11 : vector<64x128xf32> to vector<4x16x128xf32>
    %cst_11 = arith.constant dense<0.000000e+00> : vector<16x128xf32>
    %14 = vector.multi_reduction <add>, %0, %cst_11 [0] : vector<4x16x128xf32> to vector<16x128xf32>
    %c0_12 = arith.constant 0 : index
    %c0_13 = arith.constant 0 : index
    %15 = vector.load %arg2[%c0_12, %c0_13] : memref<128x128xf32, #tpu.memory_space<vmem>>, vector<128x128xf32>
    %cst_14 = arith.constant dense<0.000000e+00> : vector<16x128xf32>
    %16 = tpu.matmul %14, %15, %cst_14 {dimension_numbers = #tpu.dot_dimension_numbers<[1], [0], [0], [1], [0, 0, 1, 1], [], []>} : vector<16x128xf32>, vector<128x128xf32>, vector<16x128xf32> -> vector<16x128xf32>
    %c0_15 = arith.constant 0 : index
    %c0_16 = arith.constant 0 : index
    %17 = vector.load %arg3[%c0_15, %c0_16] : memref<1x128xf32, #tpu.memory_space<vmem>>, vector<1x128xf32>
    %18 = vector.broadcast %17 : vector<1x128xf32> to vector<16x128xf32>
    %19 = arith.addf %16, %18 : vector<16x128xf32>
    %20 = vector.shape_cast %19 : vector<16x128xf32> to vector<1x16x128xf32>
    %21 = vector.broadcast %20 : vector<1x16x128xf32> to vector<4x16x128xf32>
    %22 = arith.mulf %21, %12 : vector<4x16x128xf32>
    %23 = vector.shape_cast %22 : vector<4x16x128xf32> to vector<64x128xf32>
    %c0_17 = arith.constant 0 : index
    %c0_18 = arith.constant 0 : index
    %24 = vector.load %arg10[%c0_17, %c0_18] : memref<128x8xf32, #tpu.memory_space<vmem>>, vector<128x8xf32>
    %cst_19 = arith.constant dense<0.000000e+00> : vector<64x8xf32>
    %25 = tpu.matmul %23, %24, %cst_19 {dimension_numbers = #tpu.dot_dimension_numbers<[1], [0], [0], [1], [0, 0, 1, 1], [], []>} : vector<64x128xf32>, vector<128x8xf32>, vector<64x8xf32> -> vector<64x8xf32>
    %26 = vector.shape_cast %25 : vector<64x8xf32> to vector<4x16x8xf32>
    %cst_20 = arith.constant dense<0xFF800000> : vector<16x8xf32>
    %27 = vector.multi_reduction <maximumf>, %26, %cst_20 [0] : vector<4x16x8xf32> to vector<16x8xf32>
    %28 = vector.shape_cast %27 : vector<16x8xf32> to vector<1x16x8xf32>
    %29 = vector.broadcast %28 : vector<1x16x8xf32> to vector<4x16x8xf32>
    %30 = arith.subf %26, %29 : vector<4x16x8xf32>
    %31 = math.exp %30 : vector<4x16x8xf32>
    %cst_21 = arith.constant dense<0.000000e+00> : vector<16x8xf32>
    %32 = vector.multi_reduction <add>, %31, %cst_21 [0] : vector<4x16x8xf32> to vector<16x8xf32>
    %33 = vector.shape_cast %32 : vector<16x8xf32> to vector<1x16x8xf32>
    %34 = vector.broadcast %33 : vector<1x16x8xf32> to vector<4x16x8xf32>
    %35 = arith.divf %31, %34 : vector<4x16x8xf32>
    %36 = vector.shape_cast %35 : vector<4x16x8xf32> to vector<64x8xf32>
    %c0_22 = arith.constant 0 : index
    %c0_23 = arith.constant 0 : index
    %37 = vector.load %arg11[%c0_22, %c0_23] : memref<8x128xf32, #tpu.memory_space<vmem>>, vector<8x128xf32>
    %cst_24 = arith.constant dense<0.000000e+00> : vector<64x128xf32>
    %38 = tpu.matmul %36, %37, %cst_24 {dimension_numbers = #tpu.dot_dimension_numbers<[1], [0], [0], [1], [0, 0, 1, 1], [], []>} : vector<64x8xf32>, vector<8x128xf32>, vector<64x128xf32> -> vector<64x128xf32>
    %39 = vector.shape_cast %38 : vector<64x128xf32> to vector<4x16x128xf32>
    %40 = arith.mulf %39, %13 : vector<4x16x128xf32>
    %cst_25 = arith.constant dense<0.000000e+00> : vector<16x128xf32>
    %41 = vector.multi_reduction <add>, %40, %cst_25 [0] : vector<4x16x128xf32> to vector<16x128xf32>
    %c0_26 = arith.constant 0 : index
    %c0_27 = arith.constant 0 : index
    %42 = vector.load %arg8[%c0_26, %c0_27] : memref<128x128xf32, #tpu.memory_space<vmem>>, vector<128x128xf32>
    %cst_28 = arith.constant dense<0.000000e+00> : vector<16x128xf32>
    %43 = tpu.matmul %41, %42, %cst_28 {dimension_numbers = #tpu.dot_dimension_numbers<[1], [0], [0], [1], [0, 0, 1, 1], [], []>} : vector<16x128xf32>, vector<128x128xf32>, vector<16x128xf32> -> vector<16x128xf32>
    %c0_29 = arith.constant 0 : index
    %c0_30 = arith.constant 0 : index
    %44 = vector.load %arg9[%c0_29, %c0_30] : memref<1x128xf32, #tpu.memory_space<vmem>>, vector<1x128xf32>
    %45 = vector.broadcast %44 : vector<1x128xf32> to vector<16x128xf32>
    %46 = arith.addf %43, %45 : vector<16x128xf32>
    %c0_31 = arith.constant 0 : index
    %c0_32 = arith.constant 0 : index
    %47 = vector.load %arg12[%c0_31, %c0_32] : memref<16x128xf32, #tpu.memory_space<vmem>>, vector<16x128xf32>
    tpu.vector_store %arg12[%c0_31, %c0_32], %46 {strides = array<i32>} : memref<16x128xf32, #tpu.memory_space<vmem>>, vector<16x128xf32>,
    return
  }
  func.func @transform_0(%arg0: i32) -> (i32, i32, i32) {
    %c0_i32 = arith.constant 0 : i32
    %c0_i32_0 = arith.constant 0 : i32
    %c0_i32_1 = arith.constant 0 : i32
    return %c0_i32, %arg0, %c0_i32_0 : i32, i32, i32
  }
  func.func @transform_1(%arg0: i32) -> (i32, i32) {
    %c0_i32 = arith.constant 0 : i32
    %c0_i32_0 = arith.constant 0 : i32
    %c0_i32_1 = arith.constant 0 : i32
    return %c0_i32, %c0_i32_0 : i32, i32
  }
  func.func @transform_2(%arg0: i32) -> (i32, i32) {
    %c0_i32 = arith.constant 0 : i32
    %c0_i32_0 = arith.constant 0 : i32
    %c0_i32_1 = arith.constant 0 : i32
    return %c0_i32, %c0_i32_0 : i32, i32
  }
  func.func @transform_3(%arg0: i32) -> (i32, i32) {
    %c0_i32 = arith.constant 0 : i32
    %c0_i32_0 = arith.constant 0 : i32
    %c0_i32_1 = arith.constant 0 : i32
    return %c0_i32, %c0_i32_0 : i32, i32
  }
  func.func @transform_4(%arg0: i32) -> (i32, i32) {
    %c0_i32 = arith.constant 0 : i32
    %c0_i32_0 = arith.constant 0 : i32
    %c0_i32_1 = arith.constant 0 : i32
    return %c0_i32, %c0_i32_0 : i32, i32
  }
  func.func @transform_5(%arg0: i32) -> (i32, i32) {
    %c0_i32 = arith.constant 0 : i32
    %c0_i32_0 = arith.constant 0 : i32
    %c0_i32_1 = arith.constant 0 : i32
    return %c0_i32, %c0_i32_0 : i32, i32
  }
  func.func @transform_6(%arg0: i32) -> (i32, i32) {
    %c0_i32 = arith.constant 0 : i32
    %c0_i32_0 = arith.constant 0 : i32
    %c0_i32_1 = arith.constant 0 : i32
    return %c0_i32, %c0_i32_0 : i32, i32
  }
  func.func @transform_7(%arg0: i32) -> (i32, i32) {
    %c0_i32 = arith.constant 0 : i32
    %c0_i32_0 = arith.constant 0 : i32
    %c0_i32_1 = arith.constant 0 : i32
    return %c0_i32, %c0_i32_0 : i32, i32
  }
  func.func @transform_8(%arg0: i32) -> (i32, i32) {
    %c0_i32 = arith.constant 0 : i32
    %c0_i32_0 = arith.constant 0 : i32
    %c0_i32_1 = arith.constant 0 : i32
    return %c0_i32, %c0_i32_0 : i32, i32
  }
  func.func @transform_9(%arg0: i32) -> (i32, i32) {
    %c0_i32 = arith.constant 0 : i32
    %c0_i32_0 = arith.constant 0 : i32
    %c0_i32_1 = arith.constant 0 : i32
    return %c0_i32, %c0_i32_0 : i32, i32
  }
  func.func @transform_10(%arg0: i32) -> (i32, i32) {
    %c0_i32 = arith.constant 0 : i32
    %c0_i32_0 = arith.constant 0 : i32
    %c0_i32_1 = arith.constant 0 : i32
    return %c0_i32, %c0_i32_0 : i32, i32
  }
  func.func @transform_11(%arg0: i32) -> (i32, i32) {
    %c0_i32 = arith.constant 0 : i32
    %c0_i32_0 = arith.constant 0 : i32
    return %arg0, %c0_i32 : i32, i32
  }
}

module attributes {stable_mosaic.version = 11 : i64} {
  func.func @s2a_pool_kernel(%arg0: i32, %arg1: memref<4x16x128xf32, #tpu.memory_space<vmem>>, %arg2: memref<128x128xf32, #tpu.memory_space<vmem>>, %arg3: memref<1x128xf32, #tpu.memory_space<vmem>>, %arg4: memref<128x128xf32, #tpu.memory_space<vmem>>, %arg5: memref<1x128xf32, #tpu.memory_space<vmem>>, %arg6: memref<128x128xf32, #tpu.memory_space<vmem>>, %arg7: memref<1x128xf32, #tpu.memory_space<vmem>>, %arg8: memref<128x128xf32, #tpu.memory_space<vmem>>, %arg9: memref<1x128xf32, #tpu.memory_space<vmem>>, %arg10: memref<128x8xf32, #tpu.memory_space<vmem>>, %arg11: memref<8x128xf32, #tpu.memory_space<vmem>>, %arg12: memref<16x128xf32, #tpu.memory_space<vmem>>) attributes {dimension_semantics = [#tpu.dimension_semantics<parallel>], iteration_bounds = array<i64: 1>, scalar_prefetch = 0 : i64, scratch_operands = 0 : i64, tpu.core_type = #tpu.core_type<tc>, window_params = [{transform_indices = @transform_0, window_bounds = array<i64: 4, 16, 128>}, {pipeline_mode = #tpu.pipeline_mode<synchronous>, transform_indices = @transform_1, window_bounds = array<i64: 128, 128>}, {pipeline_mode = #tpu.pipeline_mode<synchronous>, transform_indices = @transform_2, window_bounds = array<i64: 1, 128>}, {pipeline_mode = #tpu.pipeline_mode<synchronous>, transform_indices = @transform_3, window_bounds = array<i64: 128, 128>}, {pipeline_mode = #tpu.pipeline_mode<synchronous>, transform_indices = @transform_4, window_bounds = array<i64: 1, 128>}, {pipeline_mode = #tpu.pipeline_mode<synchronous>, transform_indices = @transform_5, window_bounds = array<i64: 128, 128>}, {pipeline_mode = #tpu.pipeline_mode<synchronous>, transform_indices = @transform_6, window_bounds = array<i64: 1, 128>}, {pipeline_mode = #tpu.pipeline_mode<synchronous>, transform_indices = @transform_7, window_bounds = array<i64: 128, 128>}, {pipeline_mode = #tpu.pipeline_mode<synchronous>, transform_indices = @transform_8, window_bounds = array<i64: 1, 128>}, {pipeline_mode = #tpu.pipeline_mode<synchronous>, transform_indices = @transform_9, window_bounds = array<i64: 128, 8>}, {pipeline_mode = #tpu.pipeline_mode<synchronous>, transform_indices = @transform_10, window_bounds = array<i64: 8, 128>}, {transform_indices = @transform_11, window_bounds = array<i64: 16, 128>}]} {
    %c0 = arith.constant 0 : index
    %c0_0 = arith.constant 0 : index
    %c0_1 = arith.constant 0 : index
    %0 = vector.load %arg1[%c0, %c0_0, %c0_1] : memref<4x16x128xf32, #tpu.memory_space<vmem>>, vector<4x16x128xf32>
    %1 = vector.shape_cast %0 : vector<4x16x128xf32> to vector<64x128xf32>
    %c0_2 = arith.constant 0 : index
    %c0_3 = arith.constant 0 : index
    %2 = vector.load %arg4[%c0_2, %c0_3] : memref<128x128xf32, #tpu.memory_space<vmem>>, vector<128x128xf32>
    %cst = arith.constant dense<0.000000e+00> : vector<64x128xf32>
    %3 = tpu.matmul %1, %2, %cst {dimension_numbers = #tpu.dot_dimension_numbers<[1], [0], [0], [1], [0, 0, 1, 1], [], []>} : vector<64x128xf32>, vector<128x128xf32>, vector<64x128xf32> -> vector<64x128xf32>
    %c0_4 = arith.constant 0 : index
    %c0_5 = arith.constant 0 : index
    %4 = vector.load %arg5[%c0_4, %c0_5] : memref<1x128xf32, #tpu.memory_space<vmem>>, vector<1x128xf32>
    %5 = vector.broadcast %4 : vector<1x128xf32> to vector<64x128xf32>
    %6 = arith.addf %3, %5 : vector<64x128xf32>
    %c0_6 = arith.constant 0 : index
    %c0_7 = arith.constant 0 : index
    %7 = vector.load %arg6[%c0_6, %c0_7] : memref<128x128xf32, #tpu.memory_space<vmem>>, vector<128x128xf32>
    %cst_8 = arith.constant dense<0.000000e+00> : vector<64x128xf32>
    %8 = tpu.matmul %1, %7, %cst_8 {dimension_numbers = #tpu.dot_dimension_numbers<[1], [0], [0], [1], [0, 0, 1, 1], [], []>} : vector<64x128xf32>, vector<128x128xf32>, vector<64x128xf32> -> vector<64x128xf32>
    %c0_9 = arith.constant 0 : index
    %c0_10 = arith.constant 0 : index
    %9 = vector.load %arg7[%c0_9, %c0_10] : memref<1x128xf32, #tpu.memory_space<vmem>>, vector<1x128xf32>
    %10 = vector.broadcast %9 : vector<1x128xf32> to vector<64x128xf32>
    %11 = arith.addf %8, %10 : vector<64x128xf32>
    %12 = vector.shape_cast %6 : vector<64x128xf32> to vector<4x16x128xf32>
    %13 = vector.shape_cast %11 : vector<64x128xf32> to vector<4x16x128xf32>
    %cst_11 = arith.constant dense<0.000000e+00> : vector<16x128xf32>
    %14 = vector.multi_reduction <add>, %0, %cst_11 [0] : vector<4x16x128xf32> to vector<16x128xf32>
    %c0_12 = arith.constant 0 : index
    %c0_13 = arith.constant 0 : index
    %15 = vector.load %arg2[%c0_12, %c0_13] : memref<128x128xf32, #tpu.memory_space<vmem>>, vector<128x128xf32>
    %cst_14 = arith.constant dense<0.000000e+00> : vector<16x128xf32>
    %16 = tpu.matmul %14, %15, %cst_14 {dimension_numbers = #tpu.dot_dimension_numbers<[1], [0], [0], [1], [0, 0, 1, 1], [], []>} : vector<16x128xf32>, vector<128x128xf32>, vector<16x128xf32> -> vector<16x128xf32>
    %c0_15 = arith.constant 0 : index
    %c0_16 = arith.constant 0 : index
    %17 = vector.load %arg3[%c0_15, %c0_16] : memref<1x128xf32, #tpu.memory_space<vmem>>, vector<1x128xf32>
    %18 = vector.broadcast %17 : vector<1x128xf32> to vector<16x128xf32>
    %19 = arith.addf %16, %18 : vector<16x128xf32>
    %20 = vector.shape_cast %19 : vector<16x128xf32> to vector<1x16x128xf32>
    %21 = vector.broadcast %20 : vector<1x16x128xf32> to vector<4x16x128xf32>
    %22 = arith.mulf %21, %12 : vector<4x16x128xf32>
    %23 = vector.shape_cast %22 : vector<4x16x128xf32> to vector<64x128xf32>
    %c0_17 = arith.constant 0 : index
    %c0_18 = arith.constant 0 : index
    %24 = vector.load %arg10[%c0_17, %c0_18] : memref<128x8xf32, #tpu.memory_space<vmem>>, vector<128x8xf32>
    %cst_19 = arith.constant dense<0.000000e+00> : vector<64x8xf32>
    %25 = tpu.matmul %23, %24, %cst_19 {dimension_numbers = #tpu.dot_dimension_numbers<[1], [0], [0], [1], [0, 0, 1, 1], [], []>} : vector<64x128xf32>, vector<128x8xf32>, vector<64x8xf32> -> vector<64x8xf32>
    %26 = vector.shape_cast %25 : vector<64x8xf32> to vector<4x16x8xf32>
    %cst_20 = arith.constant dense<0xFF800000> : vector<16x8xf32>
    %27 = vector.multi_reduction <maximumf>, %26, %cst_20 [0] : vector<4x16x8xf32> to vector<16x8xf32>
    %28 = vector.shape_cast %27 : vector<16x8xf32> to vector<1x16x8xf32>
    %29 = vector.broadcast %28 : vector<1x16x8xf32> to vector<4x16x8xf32>
    %30 = arith.subf %26, %29 : vector<4x16x8xf32>
    %31 = math.exp %30 : vector<4x16x8xf32>
    %cst_21 = arith.constant dense<0.000000e+00> : vector<16x8xf32>
    %32 = vector.multi_reduction <add>, %31, %cst_21 [0] : vector<4x16x8xf32> to vector<16x8xf32>
    %33 = vector.shape_cast %32 : vector<16x8xf32> to vector<1x16x8xf32>
    %34 = vector.broadcast %33 : vector<1x16x8xf32> to vector<4x16x8xf32>
    %35 = arith.divf %31, %34 : vector<4x16x8xf32>
    %36 = vector.shape_cast %35 : vector<4x16x8xf32> to vector<64x8xf32>
    %c0_22 = arith.constant 0 : index
    %c0_23 = arith.constant 0 : index
    %37 = vector.load %arg11[%c0_22, %c0_23] : memref<8x128xf32, #tpu.memory_space<vmem>>, vector<8x128xf32>
    %cst_24 = arith.constant dense<0.000000e+00> : vector<64x128xf32>
    %38 = tpu.matmul %36, %37, %cst_24 {dimension_numbers = #tpu.dot_dimension_numbers<[1], [0], [0], [1], [0, 0, 1, 1], [], []>} : vector<64x8xf32>, vector<8x128xf32>, vector<64x128xf32> -> vector<64x128xf32>
    %39 = vector.shape_cast %38 : vector<64x128xf32> to vector<4x16x128xf32>
    %40 = arith.mulf %39, %13 : vector<4x16x128xf32>
    %cst_25 = arith.constant dense<0.000000e+00> : vector<16x128xf32>
    %41 = vector.multi_reduction <add>, %40, %cst_25 [0] : vector<4x16x128xf32> to vector<16x128xf32>
    %c0_26 = arith.constant 0 : index
    %c0_27 = arith.constant 0 : index
    %42 = vector.load %arg8[%c0_26, %c0_27] : memref<128x128xf32, #tpu.memory_space<vmem>>, vector<128x128xf32>
    %cst_28 = arith.constant dense<0.000000e+00> : vector<16x128xf32>
    %43 = tpu.matmul %41, %42, %cst_28 {dimension_numbers = #tpu.dot_dimension_numbers<[1], [0], [0], [1], [0, 0, 1, 1], [], []>} : vector<16x128xf32>, vector<128x128xf32>, vector<16x128xf32> -> vector<16x128xf32>
    %c0_29 = arith.constant 0 : index
    %c0_30 = arith.constant 0 : index
    %44 = vector.load %arg9[%c0_29, %c0_30] : memref<1x128xf32, #tpu.memory_space<vmem>>, vector<1x128xf32>
    %45 = vector.broadcast %44 : vector<1x128xf32> to vector<16x128xf32>
    %46 = arith.addf %43, %45 : vector<16x128xf32>
    %c0_31 = arith.constant 0 : index
    %c0_32 = arith.constant 0 : index
    %47 = vector.load %arg12[%c0_31, %c0_32] : memref<16x128xf32, #tpu.memory_space<vmem>>, vector<16x128xf32>
    tpu.vector_store %arg12[%c0_31, %c0_32], %46 {strides = array<i32>} : memref<16x128xf32, #tpu.memory_space<vmem>>, vector<16x128xf32>,
    return
  }
  func.func @transform_0(%arg0: i32) -> (i32, i32, i32) {
    %c0_i32 = arith.constant 0 : i32
    %c0_i32_0 = arith.constant 0 : i32
    %c0_i32_1 = arith.constant 0 : i32
    return %c0_i32, %arg0, %c0_i32_0 : i32, i32, i32
  }
  func.func @transform_1(%arg0: i32) -> (i32, i32) {
    %c0_i32 = arith.constant 0 : i32
    %c0_i32_0 = arith.constant 0 : i32
    %c0_i32_1 = arith.constant 0 : i32
    return %c0_i32, %c0_i32_0 : i32, i32
  }
  func.func @transform_2(%arg0: i32) -> (i32, i32) {
    %c0_i32 = arith.constant 0 : i32
    %c0_i32_0 = arith.constant 0 : i32
    %c0_i32_1 = arith.constant 0 : i32
    return %c0_i32, %c0_i32_0 : i32, i32
  }
  func.func @transform_3(%arg0: i32) -> (i32, i32) {
    %c0_i32 = arith.constant 0 : i32
    %c0_i32_0 = arith.constant 0 : i32
    %c0_i32_1 = arith.constant 0 : i32
    return %c0_i32, %c0_i32_0 : i32, i32
  }
  func.func @transform_4(%arg0: i32) -> (i32, i32) {
    %c0_i32 = arith.constant 0 : i32
    %c0_i32_0 = arith.constant 0 : i32
    %c0_i32_1 = arith.constant 0 : i32
    return %c0_i32, %c0_i32_0 : i32, i32
  }
  func.func @transform_5(%arg0: i32) -> (i32, i32) {
    %c0_i32 = arith.constant 0 : i32
    %c0_i32_0 = arith.constant 0 : i32
    %c0_i32_1 = arith.constant 0 : i32
    return %c0_i32, %c0_i32_0 : i32, i32
  }
  func.func @transform_6(%arg0: i32) -> (i32, i32) {
    %c0_i32 = arith.constant 0 : i32
    %c0_i32_0 = arith.constant 0 : i32
    %c0_i32_1 = arith.constant 0 : i32
    return %c0_i32, %c0_i32_0 : i32, i32
  }
  func.func @transform_7(%arg0: i32) -> (i32, i32) {
    %c0_i32 = arith.constant 0 : i32
    %c0_i32_0 = arith.constant 0 : i32
    %c0_i32_1 = arith.constant 0 : i32
    return %c0_i32, %c0_i32_0 : i32, i32
  }
  func.func @transform_8(%arg0: i32) -> (i32, i32) {
    %c0_i32 = arith.constant 0 : i32
    %c0_i32_0 = arith.constant 0 : i32
    %c0_i32_1 = arith.constant 0 : i32
    return %c0_i32, %c0_i32_0 : i32, i32
  }
  func.func @transform_9(%arg0: i32) -> (i32, i32) {
    %c0_i32 = arith.constant 0 : i32
    %c0_i32_0 = arith.constant 0 : i32
    %c0_i32_1 = arith.constant 0 : i32
    return %c0_i32, %c0_i32_0 : i32, i32
  }
  func.func @transform_10(%arg0: i32) -> (i32, i32) {
    %c0_i32 = arith.constant 0 : i32
    %c0_i32_0 = arith.constant 0 : i32
    %c0_i32_1 = arith.constant 0 : i32
    return %c0_i32, %c0_i32_0 : i32, i32
  }
  func.func @transform_11(%arg0: i32) -> (i32, i32) {
    %c0_i32 = arith.constant 0 : i32
    %c0_i32_0 = arith.constant 0 : i32
    return %arg0, %c0_i32 : i32, i32
  }
}

</mosaic_0001>

<llo_original>
// kernel: tpu_custom_call.1
$region0: #{tpu_custom_call.1}
  #allocation0 [shape = 'u32[]', space=smem, size = 0x4, offset = 0x4, fixed_abs, tag = 'smem constant byte address 0x4 - core index']
  #allocation1 [shape = 'u32[72,128]{1,0:T(1,128)}', space=vmem, size = 0x9000, scoped, tag = 'internal scratch']
  %s0 = inlined_call_operand.hbm [shape: f32[4,16,128], index: 0, kind: input, shape index: {}]
  %s1 = inlined_call_operand.vmem [shape: f32[128,128], index: 1, kind: input, shape index: {}]
  %s2 = inlined_call_operand.hbm [shape: f32[1,128], index: 2, kind: input, shape index: {}]
  %s3 = inlined_call_operand.hbm [shape: f32[128,128], index: 3, kind: input, shape index: {}]
  %s4 = inlined_call_operand.hbm [shape: f32[1,128], index: 4, kind: input, shape index: {}]
  %s5 = inlined_call_operand.hbm [shape: f32[128,128], index: 5, kind: input, shape index: {}]
  %s6 = inlined_call_operand.hbm [shape: f32[1,128], index: 6, kind: input, shape index: {}]
  %s7 = inlined_call_operand.hbm [shape: f32[128,128], index: 7, kind: input, shape index: {}]
  %s8 = inlined_call_operand.hbm [shape: f32[1,128], index: 8, kind: input, shape index: {}]
  %s9 = inlined_call_operand.vmem [shape: f32[128,8], index: 9, kind: input, shape index: {}]
  %s10 = inlined_call_operand.vmem [shape: f32[8,128], index: 10, kind: input, shape index: {}]
  %s11 = inlined_call_operand.hbm [shape: f32[16,128], index: 11, kind: output, shape index: {}]
  %s12 = sld [smem:[#allocation0]]
  $region86: #{tpu_custom_call.1} parent=0
    _
  %s14 = ssub.s32 1, %s12
  %s15 = scalar_select 0, %s14, %s12
  $region1: #{tpu_custom_call.1} parent=0
    #allocation2 [shape = 'u8[32768]{0}', space=vmem, size = 0x8000, scoped, tag = 'input window, operand 0, single buffered']
    #allocation3 [shape = 's32[1]{0}', space=sflag, size = 0x4, scoped, tag = 'scoped memory for tpu_custom_call.1']
    #allocation4 [shape = 's32[1]{0}', space=sflag, size = 0x4, scoped, tag = 'scoped memory for tpu_custom_call.1']
    #allocation5 [shape = 'u8[512]{0}', space=vmem, size = 0x400, scoped, tag = 'input window, operand 2, single buffered']
    #allocation6 [shape = 's32[1]{0}', space=sflag, size = 0x4, scoped, tag = 'scoped memory for tpu_custom_call.1']
    #allocation7 [shape = 'u8[65536]{0}', space=vmem, size = 0x10000, scoped, tag = 'input window, operand 3, single buffered']
    #allocation8 [shape = 'u8[512]{0}', space=vmem, size = 0x400, scoped, tag = 'input window, operand 4, single buffered']
    #allocation9 [shape = 's32[1]{0}', space=sflag, size = 0x4, scoped, tag = 'scoped memory for tpu_custom_call.1']
    #allocation10 [shape = 'u8[65536]{0}', space=vmem, size = 0x10000, scoped, tag = 'input window, operand 5, single buffered']
    #allocation11 [shape = 'u8[512]{0}', space=vmem, size = 0x400, scoped, tag = 'input window, operand 6, single buffered']
    #allocation12 [shape = 's32[1]{0}', space=sflag, size = 0x4, scoped, tag = 'scoped memory for tpu_custom_call.1']
    #allocation13 [shape = 'u8[65536]{0}', space=vmem, size = 0x10000, scoped, tag = 'input window, operand 7, single buffered']
    #allocation14 [shape = 'u8[512]{0}', space=vmem, size = 0x400, scoped, tag = 'input window, operand 8, single buffered']
    #allocation15 [shape = 's32[1]{0}', space=sflag, size = 0x4, scoped, tag = 'scoped memory for tpu_custom_call.1']
    #allocation16 [shape = 'u8[8192]{0}', space=vmem, size = 0x2000, scoped, tag = 'output window, operand 0, single buffered']
    %16 = vsyncpa [#allocation3], 0
    %17 = vsyncpa [#allocation6], 0
    %18 = vsyncpa [#allocation9], 0
    %19 = vsyncpa [#allocation12], 0
    %20 = vsyncpa [#allocation15], 0
    %21 = vsyncpa [#allocation4], 0
    // Predicated region
    $region2: #{tpu_custom_call.1} parent=1 // pred_check
      _
    $region3: #{tpu_custom_call.1} parent=1 // pred_check_branch
      %23 = sbr.rel (0) target = $region5
    $region4: #{tpu_custom_call.1} parent=1 // pred_region
      %25 = vsyncadd [#allocation3], 0
      %s26 = sshll.u32 %s0, 4
      %s27 = int_to_ptr.hbm [resolvable:$true] %s26
      %s28 = sshll.u32 [#allocation2], 4
      %s29 = int_to_ptr.vmem [resolvable:$true] %s28
      %34 = dma.hbm_to_vmem [thread:$0]  %s27, 1024, %s29, [#allocation3], 128, 128, 8
    $region5: #{tpu_custom_call.1} parent=1 // pred_fallthru
      _
    // Predicated region
    $region6: #{tpu_custom_call.1} parent=1 // pred_check
      _
    $region7: #{tpu_custom_call.1} parent=1 // pred_check_branch
      %36 = sbr.rel (0) target = $region9
    $region8: #{tpu_custom_call.1} parent=1 // pred_region
      _
    $region9: #{tpu_custom_call.1} parent=1 // pred_fallthru
      _
    // Predicated region
    $region10: #{tpu_custom_call.1} parent=1 // pred_check
      _
    $region11: #{tpu_custom_call.1} parent=1 // pred_check_branch
      %38 = sbr.rel (0) target = $region13
    $region12: #{tpu_custom_call.1} parent=1 // pred_region
      %40 = vsyncadd [#allocation6], 0
      %s42 = sshll.u32 %s2, 4
      %s43 = int_to_ptr.hbm [resolvable:$true] %s42
      %s44 = sshll.u32 [#allocation5], 4
      %s45 = int_to_ptr.vmem [resolvable:$true] %s44
      %47 = dma.hbm_to_vmem [thread:$0]  %s43, 16, %s45, [#allocation6]
    $region13: #{tpu_custom_call.1} parent=1 // pred_fallthru
      _
    // Predicated region
    $region14: #{tpu_custom_call.1} parent=1 // pred_check
      _
    $region15: #{tpu_custom_call.1} parent=1 // pred_check_branch
      %49 = sbr.rel (0) target = $region17
    $region16: #{tpu_custom_call.1} parent=1 // pred_region
      %51 = vsyncadd [#allocation6], 0
      %s52 = sshll.u32 %s3, 4
      %s53 = int_to_ptr.hbm [resolvable:$true] %s52
      %s54 = sshll.u32 [#allocation7], 4
      %s55 = int_to_ptr.vmem [resolvable:$true] %s54
      %60 = dma.hbm_to_vmem [thread:$0]  %s53, 2048, %s55, [#allocation6], 128, 128, 8
    $region17: #{tpu_custom_call.1} parent=1 // pred_fallthru
      _
    // Predicated region
    $region18: #{tpu_custom_call.1} parent=1 // pred_check
      _
    $region19: #{tpu_custom_call.1} parent=1 // pred_check_branch
      %62 = sbr.rel (0) target = $region21
    $region20: #{tpu_custom_call.1} parent=1 // pred_region
      %64 = vsyncadd [#allocation9], 0
      %s66 = sshll.u32 %s4, 4
      %s67 = int_to_ptr.hbm [resolvable:$true] %s66
      %s68 = sshll.u32 [#allocation8], 4
      %s69 = int_to_ptr.vmem [resolvable:$true] %s68
      %71 = dma.hbm_to_vmem [thread:$0]  %s67, 16, %s69, [#allocation9]
    $region21: #{tpu_custom_call.1} parent=1 // pred_fallthru
      _
    // Predicated region
    $region22: #{tpu_custom_call.1} parent=1 // pred_check
      _
    $region23: #{tpu_custom_call.1} parent=1 // pred_check_branch
      %73 = sbr.rel (0) target = $region25
    $region24: #{tpu_custom_call.1} parent=1 // pred_region
      %75 = vsyncadd [#allocation9], 0
      %s76 = sshll.u32 %s5, 4
      %s77 = int_to_ptr.hbm [resolvable:$true] %s76
      %s78 = sshll.u32 [#allocation10], 4
      %s79 = int_to_ptr.vmem [resolvable:$true] %s78
      %84 = dma.hbm_to_vmem [thread:$0]  %s77, 2048, %s79, [#allocation9], 128, 128, 8
    $region25: #{tpu_custom_call.1} parent=1 // pred_fallthru
      _
    // Predicated region
    $region26: #{tpu_custom_call.1} parent=1 // pred_check
      _
    $region27: #{tpu_custom_call.1} parent=1 // pred_check_branch
      %86 = sbr.rel (0) target = $region29
    $region28: #{tpu_custom_call.1} parent=1 // pred_region
      %88 = vsyncadd [#allocation12], 0
      %s90 = sshll.u32 %s6, 4
      %s91 = int_to_ptr.hbm [resolvable:$true] %s90
      %s92 = sshll.u32 [#allocation11], 4
      %s93 = int_to_ptr.vmem [resolvable:$true] %s92
      %95 = dma.hbm_to_vmem [thread:$0]  %s91, 16, %s93, [#allocation12]
    $region29: #{tpu_custom_call.1} parent=1 // pred_fallthru
      _
    // Predicated region
    $region30: #{tpu_custom_call.1} parent=1 // pred_check
      _
    $region31: #{tpu_custom_call.1} parent=1 // pred_check_branch
      %97 = sbr.rel (0) target = $region33
    $region32: #{tpu_custom_call.1} parent=1 // pred_region
      %99 = vsyncadd [#allocation12], 0
      %s100 = sshll.u32 %s7, 4
      %s101 = int_to_ptr.hbm [resolvable:$true] %s100
      %s102 = sshll.u32 [#allocation13], 4
      %s103 = int_to_ptr.vmem [resolvable:$true] %s102
      %108 = dma.hbm_to_vmem [thread:$0]  %s101, 2048, %s103, [#allocation12], 128, 128, 8
    $region33: #{tpu_custom_call.1} parent=1 // pred_fallthru
      _
    // Predicated region
    $region34: #{tpu_custom_call.1} parent=1 // pred_check
      _
    $region35: #{tpu_custom_call.1} parent=1 // pred_check_branch
      %110 = sbr.rel (0) target = $region37
    $region36: #{tpu_custom_call.1} parent=1 // pred_region
      %112 = vsyncadd [#allocation15], 0
      %s114 = sshll.u32 %s8, 4
      %s115 = int_to_ptr.hbm [resolvable:$true] %s114
      %s116 = sshll.u32 [#allocation14], 4
      %s117 = int_to_ptr.vmem [resolvable:$true] %s116
      %119 = dma.hbm_to_vmem [thread:$0]  %s115, 16, %s117, [#allocation15]
    $region37: #{tpu_custom_call.1} parent=1 // pred_fallthru
      _
    // Predicated region
    $region38: #{tpu_custom_call.1} parent=1 // pred_check
      _
    $region39: #{tpu_custom_call.1} parent=1 // pred_check_branch
      %121 = sbr.rel (0) target = $region41
    $region40: #{tpu_custom_call.1} parent=1 // pred_region
      _
    $region41: #{tpu_custom_call.1} parent=1 // pred_fallthru
      _
    // Predicated region
    $region42: #{tpu_custom_call.1} parent=1 // pred_check
      _
    $region43: #{tpu_custom_call.1} parent=1 // pred_check_branch
      %123 = sbr.rel (0) target = $region45
    $region44: #{tpu_custom_call.1} parent=1 // pred_region
      _
    $region45: #{tpu_custom_call.1} parent=1 // pred_fallthru
      _
    // Predicated region
    $region46: #{tpu_custom_call.1} parent=1 // pred_check
      _
    $region47: #{tpu_custom_call.1} parent=1 // pred_check_branch
      %125 = sbr.rel (0) target = $region49
    $region48: #{tpu_custom_call.1} parent=1 // pred_region
      %127 = dma.done [#allocation3], 1024
    $region49: #{tpu_custom_call.1} parent=1 // pred_fallthru
      _
    // Predicated region
    $region50: #{tpu_custom_call.1} parent=1 // pred_check
      _
    $region51: #{tpu_custom_call.1} parent=1 // pred_check_branch
      %129 = sbr.rel (0) target = $region53
    $region52: #{tpu_custom_call.1} parent=1 // pred_region
      %131 = dma.done [#allocation6], 16
    $region53: #{tpu_custom_call.1} parent=1 // pred_fallthru
      _
    // Predicated region
    $region54: #{tpu_custom_call.1} parent=1 // pred_check
      _
    $region55: #{tpu_custom_call.1} parent=1 // pred_check_branch
      %133 = sbr.rel (0) target = $region57
    $region56: #{tpu_custom_call.1} parent=1 // pred_region
      %135 = dma.done [#allocation6], 2048
    $region57: #{tpu_custom_call.1} parent=1 // pred_fallthru
      _
    // Predicated region
    $region58: #{tpu_custom_call.1} parent=1 // pred_check
      _
    $region59: #{tpu_custom_call.1} parent=1 // pred_check_branch
      %137 = sbr.rel (0) target = $region61
    $region60: #{tpu_custom_call.1} parent=1 // pred_region
      %139 = dma.done [#allocation9], 16
    $region61: #{tpu_custom_call.1} parent=1 // pred_fallthru
      _
    // Predicated region
    $region62: #{tpu_custom_call.1} parent=1 // pred_check
      _
    $region63: #{tpu_custom_call.1} parent=1 // pred_check_branch
      %141 = sbr.rel (0) target = $region65
    $region64: #{tpu_custom_call.1} parent=1 // pred_region
      %143 = dma.done [#allocation9], 2048
    $region65: #{tpu_custom_call.1} parent=1 // pred_fallthru
      _
    // Predicated region
    $region66: #{tpu_custom_call.1} parent=1 // pred_check
      _
    $region67: #{tpu_custom_call.1} parent=1 // pred_check_branch
      %145 = sbr.rel (0) target = $region69
    $region68: #{tpu_custom_call.1} parent=1 // pred_region
      %147 = dma.done [#allocation12], 16
    $region69: #{tpu_custom_call.1} parent=1 // pred_fallthru
      _
    // Predicated region
    $region70: #{tpu_custom_call.1} parent=1 // pred_check
      _
    $region71: #{tpu_custom_call.1} parent=1 // pred_check_branch
      %149 = sbr.rel (0) target = $region73
    $region72: #{tpu_custom_call.1} parent=1 // pred_region
      %151 = dma.done [#allocation12], 2048
    $region73: #{tpu_custom_call.1} parent=1 // pred_fallthru
      _
    // Predicated region
    $region74: #{tpu_custom_call.1} parent=1 // pred_check
      _
    $region75: #{tpu_custom_call.1} parent=1 // pred_check_branch
      %153 = sbr.rel (0) target = $region77
    $region76: #{tpu_custom_call.1} parent=1 // pred_region
      %155 = dma.done [#allocation15], 16
    $region77: #{tpu_custom_call.1} parent=1 // pred_fallthru
      _
    %v156 = vld [vmem:[#allocation2] sm:$0xff]
    %v157 = vld [vmem:[#allocation2 + $0x8] sm:$0xff]
    %v158 = vld [vmem:[#allocation2 + $0x10] sm:$0xff]
    %v159 = vld [vmem:[#allocation2 + $0x18] sm:$0xff]
    %v160 = vld [vmem:[#allocation2 + $0x20] sm:$0xff]
    %v161 = vld [vmem:[#allocation2 + $0x28] sm:$0xff]
    %v162 = vld [vmem:[#allocation2 + $0x30] sm:$0xff]
    %v163 = vld [vmem:[#allocation2 + $0x38] sm:$0xff]
    %v164 = vld [vmem:[#allocation7] sm:$0xff]
    %v165 = vld [vmem:[#allocation7 + $0x8] sm:$0xff]
    %v166 = vld [vmem:[#allocation7 + $0x10] sm:$0xff]
    %v167 = vld [vmem:[#allocation7 + $0x18] sm:$0xff]
    %v168 = vld [vmem:[#allocation7 + $0x20] sm:$0xff]
    %v169 = vld [vmem:[#allocation7 + $0x28] sm:$0xff]
    %v170 = vld [vmem:[#allocation7 + $0x30] sm:$0xff]
    %v171 = vld [vmem:[#allocation7 + $0x38] sm:$0xff]
    %v172 = vld [vmem:[#allocation7 + $0x40] sm:$0xff]
    %v173 = vld [vmem:[#allocation7 + $0x48] sm:$0xff]
    %v174 = vld [vmem:[#allocation7 + $0x50] sm:$0xff]
    %v175 = vld [vmem:[#allocation7 + $0x58] sm:$0xff]
    %v176 = vld [vmem:[#allocation7 + $0x60] sm:$0xff]
    %v177 = vld [vmem:[#allocation7 + $0x68] sm:$0xff]
    %v178 = vld [vmem:[#allocation7 + $0x70] sm:$0xff]
    %v179 = vld [vmem:[#allocation7 + $0x78] sm:$0xff]
    %v180 = vld [vmem:[#allocation8] sm:$0x1]
    %v182 = vperm.slane %v180, 0
    %184 = vmatpush.msra.mxu0 %v179
    %185 = vmatpush.msra.mxu0 %v178
    %186 = vmatpush.msra.mxu0 %v177
    %187 = vmatpush.msra.mxu0 %v176
    %188 = vmatpush.msra.mxu0 %v175
    %189 = vmatpush.msra.mxu0 %v174
    %190 = vmatpush.msra.mxu0 %v173
    %191 = vmatpush.msra.mxu0 %v172
    %192 = vmatpush.msra.mxu0 %v171
    %193 = vmatpush.msra.mxu0 %v170
    %194 = vmatpush.msra.mxu0 %v169
    %195 = vmatpush.msra.mxu0 %v168
    %196 = vmatpush.msra.mxu0 %v167
    %197 = vmatpush.msra.mxu0 %v166
    %198 = vmatpush.msra.mxu0 %v165
    %199 = vmatpush.msra.mxu0 %v164
    %200 = vmatmul.f32.gmra.mxu0 %v156
    %v201 = vpop.f32.mrf.mxu0
    %v202 = vadd.f32 %v182, %v201
    %203 = vmatmul.f32.gmra.mxu0 %v157
    %v204 = vpop.f32.mrf.mxu0
    %v205 = vadd.f32 %v182, %v204
    %206 = vmatmul.f32.gmra.mxu0 %v158
    %v207 = vpop.f32.mrf.mxu0
    %v208 = vadd.f32 %v182, %v207
    %209 = vmatmul.f32.gmra.mxu0 %v159
    %v210 = vpop.f32.mrf.mxu0
    %v211 = vadd.f32 %v182, %v210
    %212 = vmatmul.f32.gmra.mxu0 %v160
    %v213 = vpop.f32.mrf.mxu0
    %v214 = vadd.f32 %v182, %v213
    %215 = vmatmul.f32.gmra.mxu0 %v161
    %v216 = vpop.f32.mrf.mxu0
    %v217 = vadd.f32 %v182, %v216
    %218 = vmatmul.f32.gmra.mxu0 %v162
    %v219 = vpop.f32.mrf.mxu0
    %v220 = vadd.f32 %v182, %v219
    %221 = vmatmul.f32.gmra.mxu0 %v163
    %v222 = vpop.f32.mrf.mxu0
    %v223 = vadd.f32 %v182, %v222
    %224 = vdwg.mxu0
    %v225 = vld [vmem:[#allocation10] sm:$0xff]
    %v226 = vld [vmem:[#allocation10 + $0x8] sm:$0xff]
    %v227 = vld [vmem:[#allocation10 + $0x10] sm:$0xff]
    %v228 = vld [vmem:[#allocation10 + $0x18] sm:$0xff]
    %v229 = vld [vmem:[#allocation10 + $0x20] sm:$0xff]
    %v230 = vld [vmem:[#allocation10 + $0x28] sm:$0xff]
    %v231 = vld [vmem:[#allocation10 + $0x30] sm:$0xff]
    %v232 = vld [vmem:[#allocation10 + $0x38] sm:$0xff]
    %v233 = vld [vmem:[#allocation10 + $0x40] sm:$0xff]
    %v234 = vld [vmem:[#allocation10 + $0x48] sm:$0xff]
    %v235 = vld [vmem:[#allocation10 + $0x50] sm:$0xff]
    %v236 = vld [vmem:[#allocation10 + $0x58] sm:$0xff]
    %v237 = vld [vmem:[#allocation10 + $0x60] sm:$0xff]
    %v238 = vld [vmem:[#allocation10 + $0x68] sm:$0xff]
    %v239 = vld [vmem:[#allocation10 + $0x70] sm:$0xff]
    %v240 = vld [vmem:[#allocation10 + $0x78] sm:$0xff]
    %v241 = vld [vmem:[#allocation11] sm:$0x1]
    %v243 = vperm.slane %v241, 0
    %245 = vmatpush.msra.mxu0 %v240
    %246 = vmatpush.msra.mxu0 %v239
    %247 = vmatpush.msra.mxu0 %v238
    %248 = vmatpush.msra.mxu0 %v237
    %249 = vmatpush.msra.mxu0 %v236
    %250 = vmatpush.msra.mxu0 %v235
    %251 = vmatpush.msra.mxu0 %v234
    %252 = vmatpush.msra.mxu0 %v233
    %253 = vmatpush.msra.mxu0 %v232
    %254 = vmatpush.msra.mxu0 %v231
    %255 = vmatpush.msra.mxu0 %v230
    %256 = vmatpush.msra.mxu0 %v229
    %257 = vmatpush.msra.mxu0 %v228
    %258 = vmatpush.msra.mxu0 %v227
    %259 = vmatpush.msra.mxu0 %v226
    %260 = vmatpush.msra.mxu0 %v225
    %261 = vmatmul.f32.gmra.mxu0 %v156
    %v262 = vpop.f32.mrf.mxu0
    %v263 = vadd.f32 %v243, %v262
    %264 = vmatmul.f32.gmra.mxu0 %v157
    %v265 = vpop.f32.mrf.mxu0
    %v266 = vadd.f32 %v243, %v265
    %267 = vmatmul.f32.gmra.mxu0 %v158
    %v268 = vpop.f32.mrf.mxu0
    %v269 = vadd.f32 %v243, %v268
    %270 = vmatmul.f32.gmra.mxu0 %v159
    %v271 = vpop.f32.mrf.mxu0
    %v272 = vadd.f32 %v243, %v271
    %273 = vmatmul.f32.gmra.mxu0 %v160
    %v274 = vpop.f32.mrf.mxu0
    %v275 = vadd.f32 %v243, %v274
    %276 = vmatmul.f32.gmra.mxu0 %v161
    %v277 = vpop.f32.mrf.mxu0
    %v278 = vadd.f32 %v243, %v277
    %279 = vmatmul.f32.gmra.mxu0 %v162
    %v280 = vpop.f32.mrf.mxu0
    %v281 = vadd.f32 %v243, %v280
    %282 = vmatmul.f32.gmra.mxu0 %v163
    %v283 = vpop.f32.mrf.mxu0
    %v284 = vadd.f32 %v243, %v283
    %285 = vdwg.mxu0
    %v286 = vadd.f32 %v156, %v158
    %v287 = vadd.f32 %v286, %v160
    %v288 = vadd.f32 %v287, %v162
    %v289 = vadd.f32 %v157, %v159
    %v290 = vadd.f32 %v289, %v161
    %v291 = vadd.f32 %v290, %v163
    %v292 = vld [vmem:[%s1] sm:$0xff]
    %v293 = vld [vmem:[%s1 + $0x8] sm:$0xff]
    %v294 = vld [vmem:[%s1 + $0x10] sm:$0xff]
    %v295 = vld [vmem:[%s1 + $0x18] sm:$0xff]
    %v296 = vld [vmem:[%s1 + $0x20] sm:$0xff]
    %v297 = vld [vmem:[%s1 + $0x28] sm:$0xff]
    %v298 = vld [vmem:[%s1 + $0x30] sm:$0xff]
    %v299 = vld [vmem:[%s1 + $0x38] sm:$0xff]
    %v300 = vld [vmem:[%s1 + $0x40] sm:$0xff]
    %v301 = vld [vmem:[%s1 + $0x48] sm:$0xff]
    %v302 = vld [vmem:[%s1 + $0x50] sm:$0xff]
    %v303 = vld [vmem:[%s1 + $0x58] sm:$0xff]
    %v304 = vld [vmem:[%s1 + $0x60] sm:$0xff]
    %v305 = vld [vmem:[%s1 + $0x68] sm:$0xff]
    %v306 = vld [vmem:[%s1 + $0x70] sm:$0xff]
    %v307 = vld [vmem:[%s1 + $0x78] sm:$0xff]
    %v308 = vld [vmem:[#allocation5] sm:$0x1]
    %v310 = vperm.slane %v308, 0
    %312 = vmatpush.msra.mxu0 %v307
    %313 = vmatpush.msra.mxu0 %v306
    %314 = vmatpush.msra.mxu0 %v305
    %315 = vmatpush.msra.mxu0 %v304
    %316 = vmatpush.msra.mxu0 %v303
    %317 = vmatpush.msra.mxu0 %v302
    %318 = vmatpush.msra.mxu0 %v301
    %319 = vmatpush.msra.mxu0 %v300
    %320 = vmatpush.msra.mxu0 %v299
    %321 = vmatpush.msra.mxu0 %v298
    %322 = vmatpush.msra.mxu0 %v297
    %323 = vmatpush.msra.mxu0 %v296
    %324 = vmatpush.msra.mxu0 %v295
    %325 = vmatpush.msra.mxu0 %v294
    %326 = vmatpush.msra.mxu0 %v293
    %327 = vmatpush.msra.mxu0 %v292
    %328 = vmatmul.f32.gmra.mxu0 %v288
    %v329 = vpop.f32.mrf.mxu0
    %v330 = vadd.f32 %v310, %v329
    %331 = vmatmul.f32.gmra.mxu0 %v291
    %v332 = vpop.f32.mrf.mxu0
    %v333 = vadd.f32 %v310, %v332
    %334 = vdwg.mxu0
    %v335 = vmul.f32 %v330, %v202
    %v336 = vmul.f32 %v333, %v205
    %v337 = vmul.f32 %v330, %v208
    %v338 = vmul.f32 %v333, %v211
    %v339 = vmul.f32 %v330, %v214
    %v340 = vmul.f32 %v333, %v217
    %v341 = vmul.f32 %v330, %v220
    %v342 = vmul.f32 %v333, %v223
    %v343 = vld [vmem:[%s9] sm:$0xff]
    %v344 = vld [vmem:[%s9 + $0x8] sm:$0xff]
    %v345 = vld [vmem:[%s9 + $0x10] sm:$0xff]
    %v346 = vld [vmem:[%s9 + $0x18] sm:$0xff]
    %v347 = vld [vmem:[%s9 + $0x20] sm:$0xff]
    %v348 = vld [vmem:[%s9 + $0x28] sm:$0xff]
    %v349 = vld [vmem:[%s9 + $0x30] sm:$0xff]
    %v350 = vld [vmem:[%s9 + $0x38] sm:$0xff]
    %v351 = vld [vmem:[%s9 + $0x40] sm:$0xff]
    %v352 = vld [vmem:[%s9 + $0x48] sm:$0xff]
    %v353 = vld [vmem:[%s9 + $0x50] sm:$0xff]
    %v354 = vld [vmem:[%s9 + $0x58] sm:$0xff]
    %v355 = vld [vmem:[%s9 + $0x60] sm:$0xff]
    %v356 = vld [vmem:[%s9 + $0x68] sm:$0xff]
    %v357 = vld [vmem:[%s9 + $0x70] sm:$0xff]
    %v358 = vld [vmem:[%s9 + $0x78] sm:$0xff]
    %359 = vmatpush.msra.mxu0 %v358
    %360 = vmatpush.msra.mxu0 %v357
    %361 = vmatpush.msra.mxu0 %v356
    %362 = vmatpush.msra.mxu0 %v355
    %363 = vmatpush.msra.mxu0 %v354
    %364 = vmatpush.msra.mxu0 %v353
    %365 = vmatpush.msra.mxu0 %v352
    %366 = vmatpush.msra.mxu0 %v351
    %367 = vmatpush.msra.mxu0 %v350
    %368 = vmatpush.msra.mxu0 %v349
    %369 = vmatpush.msra.mxu0 %v348
    %370 = vmatpush.msra.mxu0 %v347
    %371 = vmatpush.msra.mxu0 %v346
    %372 = vmatpush.msra.mxu0 %v345
    %373 = vmatpush.msra.mxu0 %v344
    %374 = vmatpush.msra.mxu0 %v343
    %375 = vmatmul.f32.gmra.mxu0 %v335
    %v376 = vpop.f32.mrf.mxu0
    %v377 = vadd.f32 0.0, %v376
    %378 = vmatmul.f32.gmra.mxu0 %v336
    %v379 = vpop.f32.mrf.mxu0
    %v380 = vadd.f32 0.0, %v379
    %381 = vmatmul.f32.gmra.mxu0 %v337
    %v382 = vpop.f32.mrf.mxu0
    %v383 = vadd.f32 0.0, %v382
    %384 = vmatmul.f32.gmra.mxu0 %v338
    %v385 = vpop.f32.mrf.mxu0
    %v386 = vadd.f32 0.0, %v385
    %387 = vmatmul.f32.gmra.mxu0 %v339
    %v388 = vpop.f32.mrf.mxu0
    %v389 = vadd.f32 0.0, %v388
    %390 = vmatmul.f32.gmra.mxu0 %v340
    %v391 = vpop.f32.mrf.mxu0
    %v392 = vadd.f32 0.0, %v391
    %393 = vmatmul.f32.gmra.mxu0 %v341
    %v394 = vpop.f32.mrf.mxu0
    %v395 = vadd.f32 0.0, %v394
    %396 = vmatmul.f32.gmra.mxu0 %v342
    %v397 = vpop.f32.mrf.mxu0
    %v398 = vadd.f32 0.0, %v397
    %399 = vdwg.mxu0
    %vm400 = vcmask 64512
    %v401 = vsel %vm400, %v377, -inf
    %v402 = vsel %vm400, %v383, -inf
    %v403 = vsel %vm400, %v389, -inf
    %v404 = vmax.f32 %v401, %v403
    %v405 = vsel %vm400, %v395, -inf
    %v406 = vmax.f32 %v402, %v405
    %v407 = vmax.f32 %v404, %v406
    %v408 = vsel %vm400, %v380, -inf
    %v409 = vsel %vm400, %v386, -inf
    %v410 = vsel %vm400, %v392, -inf
    %v411 = vmax.f32 %v408, %v410
    %v412 = vsel %vm400, %v398, -inf
    %v413 = vmax.f32 %v409, %v412
    %v414 = vmax.f32 %v411, %v413
    %v415 = vsub.f32 %v377, %v407
    %v416 = vsub.f32 %v380, %v414
    %v417 = vsub.f32 %v383, %v407
    %v418 = vsub.f32 %v386, %v414
    %v419 = vsub.f32 %v389, %v407
    %v420 = vsub.f32 %v392, %v414
    %v421 = vsub.f32 %v395, %v407
    %v422 = vsub.f32 %v398, %v414
    %v423 = vmul.f32 %v415, 1.442695
    %v424 = vpow.pop %v423
    %v425 = vmul.f32 %v416, 1.442695
    %v426 = vpow.pop %v425
    %v427 = vmul.f32 %v417, 1.442695
    %v428 = vpow.pop %v427
    %v429 = vmul.f32 %v418, 1.442695
    %v430 = vpow.pop %v429
    %v431 = vmul.f32 %v419, 1.442695
    %v432 = vpow.pop %v431
    %v433 = vmul.f32 %v420, 1.442695
    %v434 = vpow.pop %v433
    %v435 = vmul.f32 %v421, 1.442695
    %v436 = vpow.pop %v435
    %v437 = vmul.f32 %v422, 1.442695
    %v438 = vpow.pop %v437
    %v439 = vsel %vm400, %v424, 0.0
    %v440 = vsel %vm400, %v428, 0.0
    %v441 = vadd.f32 %v439, %v440
    %v442 = vsel %vm400, %v432, 0.0
    %v443 = vadd.f32 %v441, %v442
    %v444 = vsel %vm400, %v436, 0.0
    %v445 = vadd.f32 %v443, %v444
    %v446 = vsel %vm400, %v426, 0.0
    %v447 = vsel %vm400, %v430, 0.0
    %v448 = vadd.f32 %v446, %v447
    %v449 = vsel %vm400, %v434, 0.0
    %v450 = vadd.f32 %v448, %v449
    %v451 = vsel %vm400, %v438, 0.0
    %v452 = vadd.f32 %v450, %v451
    %v453 = vrcp.pop %v445
    %v454 = vmul.f32 %v445, %v453
    %v455 = vsub.f32 1.0, %v454
    %v456 = vmul.f32 %v453, %v455
    %v457 = vadd.f32 %v453, %v456
    %vm458 = vweird.f32 %v445
    %vm459 = vweird.f32 %v453
    %vm460 = vmor %vm458, %vm459
    %v461 = vsel %vm460, %v453, %v457
    %v462 = vand.u32 2147483647, %v445
    %vm463 = vcmp.eq.f32.partialorder %v462, 8.507059e+37
    %v464 = vand.u32 %v445, 2147483648
    %v465 = vor.u32 1.1754944e-38, %v464
    %v466 = vsel %vm463, %v465, %v461
    %v467 = vmul.f32 %v424, %v466
    %v468 = vrcp.pop %v452
    %v469 = vmul.f32 %v452, %v468
    %v470 = vsub.f32 1.0, %v469
    %v471 = vmul.f32 %v468, %v470
    %v472 = vadd.f32 %v468, %v471
    %vm473 = vweird.f32 %v452
    %vm474 = vweird.f32 %v468
    %vm475 = vmor %vm473, %vm474
    %v476 = vsel %vm475, %v468, %v472
    %v477 = vand.u32 2147483647, %v452
    %vm478 = vcmp.eq.f32.partialorder %v477, 8.507059e+37
    %v479 = vand.u32 %v452, 2147483648
    %v480 = vor.u32 1.1754944e-38, %v479
    %v481 = vsel %vm478, %v480, %v476
    %v482 = vmul.f32 %v426, %v481
    %v483 = vmul.f32 %v428, %v466
    %v484 = vmul.f32 %v430, %v481
    %v485 = vmul.f32 %v432, %v466
    %v486 = vmul.f32 %v434, %v481
    %v487 = vmul.f32 %v436, %v466
    %v488 = vmul.f32 %v438, %v481
    %v489 = vld [vmem:[%s10] sm:$0xff]
    %v491 = vsel %vm400, %v467, 0
    %v494 = vsel %vm400, %v482, 0
    %v497 = vsel %vm400, %v483, 0
    %v500 = vsel %vm400, %v484, 0
    %v503 = vsel %vm400, %v485, 0
    %v506 = vsel %vm400, %v486, 0
    %v509 = vsel %vm400, %v487, 0
    %v512 = vsel %vm400, %v488, 0
    %514 = vmatpush.msra.mxu0 0.0
    %515 = vmatpush.msra.mxu0 0.0
    %516 = vmatpush.msra.mxu0 0.0
    %517 = vmatpush.msra.mxu0 0.0
    %518 = vmatpush.msra.mxu0 0.0
    %519 = vmatpush.msra.mxu0 0.0
    %520 = vmatpush.msra.mxu0 0.0
    %521 = vmatpush.msra.mxu0 0.0
    %522 = vmatpush.msra.mxu0 0.0
    %523 = vmatpush.msra.mxu0 0.0
    %524 = vmatpush.msra.mxu0 0.0
    %525 = vmatpush.msra.mxu0 0.0
    %526 = vmatpush.msra.mxu0 0.0
    %527 = vmatpush.msra.mxu0 0.0
    %528 = vmatpush.msra.mxu0 0.0
    %529 = vmatpush.msra.mxu0 %v489
    %530 = vmatmul.f32.gmra.mxu0 %v491
    %v531 = vpop.f32.mrf.mxu0
    %v532 = vadd.f32 0.0, %v531
    %533 = vmatmul.f32.gmra.mxu0 %v494
    %v534 = vpop.f32.mrf.mxu0
    %v535 = vadd.f32 0.0, %v534
    %536 = vmatmul.f32.gmra.mxu0 %v497
    %v537 = vpop.f32.mrf.mxu0
    %v538 = vadd.f32 0.0, %v537
    %539 = vmatmul.f32.gmra.mxu0 %v500
    %v540 = vpop.f32.mrf.mxu0
    %v541 = vadd.f32 0.0, %v540
    %542 = vmatmul.f32.gmra.mxu0 %v503
    %v543 = vpop.f32.mrf.mxu0
    %v544 = vadd.f32 0.0, %v543
    %545 = vmatmul.f32.gmra.mxu0 %v506
    %v546 = vpop.f32.mrf.mxu0
    %v547 = vadd.f32 0.0, %v546
    %548 = vmatmul.f32.gmra.mxu0 %v509
    %v549 = vpop.f32.mrf.mxu0
    %v550 = vadd.f32 0.0, %v549
    %551 = vmatmul.f32.gmra.mxu0 %v512
    %v552 = vpop.f32.mrf.mxu0
    %v553 = vadd.f32 0.0, %v552
    %554 = vdwg.mxu0
    %v555 = vmul.f32 %v532, %v263
    %v556 = vmul.f32 %v535, %v266
    %v557 = vmul.f32 %v538, %v269
    %v558 = vmul.f32 %v541, %v272
    %v559 = vmul.f32 %v544, %v275
    %v560 = vmul.f32 %v547, %v278
    %v561 = vmul.f32 %v550, %v281
    %v562 = vmul.f32 %v553, %v284
    %v563 = vadd.f32 %v555, %v557
    %v564 = vadd.f32 %v563, %v559
    %v565 = vadd.f32 %v564, %v561
    %v566 = vadd.f32 %v556, %v558
    %v567 = vadd.f32 %v566, %v560
    %v568 = vadd.f32 %v567, %v562
    %v569 = vld [vmem:[#allocation13] sm:$0xff]
    %v570 = vld [vmem:[#allocation13 + $0x8] sm:$0xff]
    %v571 = vld [vmem:[#allocation13 + $0x10] sm:$0xff]
    %v572 = vld [vmem:[#allocation13 + $0x18] sm:$0xff]
    %v573 = vld [vmem:[#allocation13 + $0x20] sm:$0xff]
    %v574 = vld [vmem:[#allocation13 + $0x28] sm:$0xff]
    %v575 = vld [vmem:[#allocation13 + $0x30] sm:$0xff]
    %v576 = vld [vmem:[#allocation13 + $0x38] sm:$0xff]
    %v577 = vld [vmem:[#allocation13 + $0x40] sm:$0xff]
    %v578 = vld [vmem:[#allocation13 + $0x48] sm:$0xff]
    %v579 = vld [vmem:[#allocation13 + $0x50] sm:$0xff]
    %v580 = vld [vmem:[#allocation13 + $0x58] sm:$0xff]
    %v581 = vld [vmem:[#allocation13 + $0x60] sm:$0xff]
    %v582 = vld [vmem:[#allocation13 + $0x68] sm:$0xff]
    %v583 = vld [vmem:[#allocation13 + $0x70] sm:$0xff]
    %v584 = vld [vmem:[#allocation13 + $0x78] sm:$0xff]
    %v585 = vld [vmem:[#allocation14] sm:$0x1]
    %v587 = vperm.slane %v585, 0
    %589 = vmatpush.msra.mxu0 %v584
    %590 = vmatpush.msra.mxu0 %v583
    %591 = vmatpush.msra.mxu0 %v582
    %592 = vmatpush.msra.mxu0 %v581
    %593 = vmatpush.msra.mxu0 %v580
    %594 = vmatpush.msra.mxu0 %v579
    %595 = vmatpush.msra.mxu0 %v578
    %596 = vmatpush.msra.mxu0 %v577
    %597 = vmatpush.msra.mxu0 %v576
    %598 = vmatpush.msra.mxu0 %v575
    %599 = vmatpush.msra.mxu0 %v574
    %600 = vmatpush.msra.mxu0 %v573
    %601 = vmatpush.msra.mxu0 %v572
    %602 = vmatpush.msra.mxu0 %v571
    %603 = vmatpush.msra.mxu0 %v570
    %604 = vmatpush.msra.mxu0 %v569
    %605 = vmatmul.f32.gmra.mxu0 %v565
    %v606 = vpop.f32.mrf.mxu0
    %v607 = vadd.f32 %v587, %v606
    %608 = vmatmul.f32.gmra.mxu0 %v568
    %v609 = vpop.f32.mrf.mxu0
    %v610 = vadd.f32 %v587, %v609
    %611 = vdwg.mxu0
    %612 = vst [vmem:[#allocation16] sm:$0xff] %v607
    %613 = vst [vmem:[#allocation16 + $0x8] sm:$0xff] %v610
    // Predicated region
    $region78: #{tpu_custom_call.1} parent=1 // pred_check
      _
    $region79: #{tpu_custom_call.1} parent=1 // pred_check_branch
      %615 = sbr.rel (0) target = $region81
    $region80: #{tpu_custom_call.1} parent=1 // pred_region
      %617 = vsyncadd [#allocation4], 0
      %s618 = sshll.u32 [#allocation16], 4
      %s619 = int_to_ptr.vmem [resolvable:$true] %s618
      %s620 = sshll.u32 %s11, 4
      %s621 = int_to_ptr.hbm [resolvable:$true] %s620
      %626 = dma.vmem_to_hbm [thread:$0]  %s619, 256, %s621, [#allocation4], 128, 128, 8
    $region81: #{tpu_custom_call.1} parent=1 // pred_fallthru
      _
    // Predicated region
    $region82: #{tpu_custom_call.1} parent=1 // pred_check
      _
    $region83: #{tpu_custom_call.1} parent=1 // pred_check_branch
      %628 = sbr.rel (0) target = $region85
    $region84: #{tpu_custom_call.1} parent=1 // pred_region
      %630 = dma.done [#allocation4], 256
    $region85: #{tpu_custom_call.1} parent=1 // pred_fallthru
      _
    %631 = vsyncpa [#allocation3], 1
    %632 = vsyncpa [#allocation6], 1
    %633 = vsyncpa [#allocation9], 1
    %634 = vsyncpa [#allocation12], 1
    %635 = vsyncpa [#allocation15], 1
    %636 = vsyncpa [#allocation4], 1

// kernel: tpu_custom_call.1
$region0: #{tpu_custom_call.1}
  #allocation0 [shape = 'u32[]', space=smem, size = 0x4, offset = 0x4, fixed_abs, tag = 'smem constant byte address 0x4 - core index']
  #allocation1 [shape = 'u32[72,128]{1,0:T(1,128)}', space=vmem, size = 0x9000, scoped, tag = 'internal scratch']
  %s0 = inlined_call_operand.hbm [shape: f32[4,16,128], index: 0, kind: input, shape index: {}]
  %s1 = inlined_call_operand.vmem [shape: f32[128,128], index: 1, kind: input, shape index: {}]
  %s2 = inlined_call_operand.hbm [shape: f32[1,128], index: 2, kind: input, shape index: {}]
  %s3 = inlined_call_operand.hbm [shape: f32[128,128], index: 3, kind: input, shape index: {}]
  %s4 = inlined_call_operand.hbm [shape: f32[1,128], index: 4, kind: input, shape index: {}]
  %s5 = inlined_call_operand.hbm [shape: f32[128,128], index: 5, kind: input, shape index: {}]
  %s6 = inlined_call_operand.hbm [shape: f32[1,128], index: 6, kind: input, shape index: {}]
  %s7 = inlined_call_operand.hbm [shape: f32[128,128], index: 7, kind: input, shape index: {}]
  %s8 = inlined_call_operand.hbm [shape: f32[1,128], index: 8, kind: input, shape index: {}]
  %s9 = inlined_call_operand.vmem [shape: f32[128,8], index: 9, kind: input, shape index: {}]
  %s10 = inlined_call_operand.vmem [shape: f32[8,128], index: 10, kind: input, shape index: {}]
  %s11 = inlined_call_operand.hbm [shape: f32[16,128], index: 11, kind: output, shape index: {}]
  %s12 = sld [smem:[#allocation0]]
  $region86: #{tpu_custom_call.1} parent=0
    _
  %s14 = ssub.s32 1, %s12
  %s15 = scalar_select 0, %s14, %s12
  $region1: #{tpu_custom_call.1} parent=0
    #allocation2 [shape = 'u8[32768]{0}', space=vmem, size = 0x8000, scoped, tag = 'input window, operand 0, single buffered']
    #allocation3 [shape = 's32[1]{0}', space=sflag, size = 0x4, scoped, tag = 'scoped memory for tpu_custom_call.1']
    #allocation4 [shape = 's32[1]{0}', space=sflag, size = 0x4, scoped, tag = 'scoped memory for tpu_custom_call.1']
    #allocation5 [shape = 'u8[512]{0}', space=vmem, size = 0x400, scoped, tag = 'input window, operand 2, single buffered']
    #allocation6 [shape = 's32[1]{0}', space=sflag, size = 0x4, scoped, tag = 'scoped memory for tpu_custom_call.1']
    #allocation7 [shape = 'u8[65536]{0}', space=vmem, size = 0x10000, scoped, tag = 'input window, operand 3, single buffered']
    #allocation8 [shape = 'u8[512]{0}', space=vmem, size = 0x400, scoped, tag = 'input window, operand 4, single buffered']
    #allocation9 [shape = 's32[1]{0}', space=sflag, size = 0x4, scoped, tag = 'scoped memory for tpu_custom_call.1']
    #allocation10 [shape = 'u8[65536]{0}', space=vmem, size = 0x10000, scoped, tag = 'input window, operand 5, single buffered']
    #allocation11 [shape = 'u8[512]{0}', space=vmem, size = 0x400, scoped, tag = 'input window, operand 6, single buffered']
    #allocation12 [shape = 's32[1]{0}', space=sflag, size = 0x4, scoped, tag = 'scoped memory for tpu_custom_call.1']
    #allocation13 [shape = 'u8[65536]{0}', space=vmem, size = 0x10000, scoped, tag = 'input window, operand 7, single buffered']
    #allocation14 [shape = 'u8[512]{0}', space=vmem, size = 0x400, scoped, tag = 'input window, operand 8, single buffered']
    #allocation15 [shape = 's32[1]{0}', space=sflag, size = 0x4, scoped, tag = 'scoped memory for tpu_custom_call.1']
    #allocation16 [shape = 'u8[8192]{0}', space=vmem, size = 0x2000, scoped, tag = 'output window, operand 0, single buffered']
    %16 = vsyncpa [#allocation3], 0
    %17 = vsyncpa [#allocation6], 0
    %18 = vsyncpa [#allocation9], 0
    %19 = vsyncpa [#allocation12], 0
    %20 = vsyncpa [#allocation15], 0
    %21 = vsyncpa [#allocation4], 0
    // Predicated region
    $region2: #{tpu_custom_call.1} parent=1 // pred_check
      _
    $region3: #{tpu_custom_call.1} parent=1 // pred_check_branch
      %23 = sbr.rel (0) target = $region5
    $region4: #{tpu_custom_call.1} parent=1 // pred_region
      %25 = vsyncadd [#allocation3], 0
      %s26 = sshll.u32 %s0, 4
      %s27 = int_to_ptr.hbm [resolvable:$true] %s26
      %s28 = sshll.u32 [#allocation2], 4
      %s29 = int_to_ptr.vmem [resolvable:$true] %s28
      %34 = dma.hbm_to_vmem [thread:$0]  %s27, 1024, %s29, [#allocation3], 128, 128, 8
    $region5: #{tpu_custom_call.1} parent=1 // pred_fallthru
      _
    // Predicated region
    $region6: #{tpu_custom_call.1} parent=1 // pred_check
      _
    $region7: #{tpu_custom_call.1} parent=1 // pred_check_branch
      %36 = sbr.rel (0) target = $region9
    $region8: #{tpu_custom_call.1} parent=1 // pred_region
      _
    $region9: #{tpu_custom_call.1} parent=1 // pred_fallthru
      _
    // Predicated region
    $region10: #{tpu_custom_call.1} parent=1 // pred_check
      _
    $region11: #{tpu_custom_call.1} parent=1 // pred_check_branch
      %38 = sbr.rel (0) target = $region13
    $region12: #{tpu_custom_call.1} parent=1 // pred_region
      %40 = vsyncadd [#allocation6], 0
      %s42 = sshll.u32 %s2, 4
      %s43 = int_to_ptr.hbm [resolvable:$true] %s42
      %s44 = sshll.u32 [#allocation5], 4
      %s45 = int_to_ptr.vmem [resolvable:$true] %s44
      %47 = dma.hbm_to_vmem [thread:$0]  %s43, 16, %s45, [#allocation6]
    $region13: #{tpu_custom_call.1} parent=1 // pred_fallthru
      _
    // Predicated region
    $region14: #{tpu_custom_call.1} parent=1 // pred_check
      _
    $region15: #{tpu_custom_call.1} parent=1 // pred_check_branch
      %49 = sbr.rel (0) target = $region17
    $region16: #{tpu_custom_call.1} parent=1 // pred_region
      %51 = vsyncadd [#allocation6], 0
      %s52 = sshll.u32 %s3, 4
      %s53 = int_to_ptr.hbm [resolvable:$true] %s52
      %s54 = sshll.u32 [#allocation7], 4
      %s55 = int_to_ptr.vmem [resolvable:$true] %s54
      %60 = dma.hbm_to_vmem [thread:$0]  %s53, 2048, %s55, [#allocation6], 128, 128, 8
    $region17: #{tpu_custom_call.1} parent=1 // pred_fallthru
      _
    // Predicated region
    $region18: #{tpu_custom_call.1} parent=1 // pred_check
      _
    $region19: #{tpu_custom_call.1} parent=1 // pred_check_branch
      %62 = sbr.rel (0) target = $region21
    $region20: #{tpu_custom_call.1} parent=1 // pred_region
      %64 = vsyncadd [#allocation9], 0
      %s66 = sshll.u32 %s4, 4
      %s67 = int_to_ptr.hbm [resolvable:$true] %s66
      %s68 = sshll.u32 [#allocation8], 4
      %s69 = int_to_ptr.vmem [resolvable:$true] %s68
      %71 = dma.hbm_to_vmem [thread:$0]  %s67, 16, %s69, [#allocation9]
    $region21: #{tpu_custom_call.1} parent=1 // pred_fallthru
      _
    // Predicated region
    $region22: #{tpu_custom_call.1} parent=1 // pred_check
      _
    $region23: #{tpu_custom_call.1} parent=1 // pred_check_branch
      %73 = sbr.rel (0) target = $region25
    $region24: #{tpu_custom_call.1} parent=1 // pred_region
      %75 = vsyncadd [#allocation9], 0
      %s76 = sshll.u32 %s5, 4
      %s77 = int_to_ptr.hbm [resolvable:$true] %s76
      %s78 = sshll.u32 [#allocation10], 4
      %s79 = int_to_ptr.vmem [resolvable:$true] %s78
      %84 = dma.hbm_to_vmem [thread:$0]  %s77, 2048, %s79, [#allocation9], 128, 128, 8
    $region25: #{tpu_custom_call.1} parent=1 // pred_fallthru
      _
    // Predicated region
    $region26: #{tpu_custom_call.1} parent=1 // pred_check
      _
    $region27: #{tpu_custom_call.1} parent=1 // pred_check_branch
      %86 = sbr.rel (0) target = $region29
    $region28: #{tpu_custom_call.1} parent=1 // pred_region
      %88 = vsyncadd [#allocation12], 0
      %s90 = sshll.u32 %s6, 4
      %s91 = int_to_ptr.hbm [resolvable:$true] %s90
      %s92 = sshll.u32 [#allocation11], 4
      %s93 = int_to_ptr.vmem [resolvable:$true] %s92
      %95 = dma.hbm_to_vmem [thread:$0]  %s91, 16, %s93, [#allocation12]
    $region29: #{tpu_custom_call.1} parent=1 // pred_fallthru
      _
    // Predicated region
    $region30: #{tpu_custom_call.1} parent=1 // pred_check
      _
    $region31: #{tpu_custom_call.1} parent=1 // pred_check_branch
      %97 = sbr.rel (0) target = $region33
    $region32: #{tpu_custom_call.1} parent=1 // pred_region
      %99 = vsyncadd [#allocation12], 0
      %s100 = sshll.u32 %s7, 4
      %s101 = int_to_ptr.hbm [resolvable:$true] %s100
      %s102 = sshll.u32 [#allocation13], 4
      %s103 = int_to_ptr.vmem [resolvable:$true] %s102
      %108 = dma.hbm_to_vmem [thread:$0]  %s101, 2048, %s103, [#allocation12], 128, 128, 8
    $region33: #{tpu_custom_call.1} parent=1 // pred_fallthru
      _
    // Predicated region
    $region34: #{tpu_custom_call.1} parent=1 // pred_check
      _
    $region35: #{tpu_custom_call.1} parent=1 // pred_check_branch
      %110 = sbr.rel (0) target = $region37
    $region36: #{tpu_custom_call.1} parent=1 // pred_region
      %112 = vsyncadd [#allocation15], 0
      %s114 = sshll.u32 %s8, 4
      %s115 = int_to_ptr.hbm [resolvable:$true] %s114
      %s116 = sshll.u32 [#allocation14], 4
      %s117 = int_to_ptr.vmem [resolvable:$true] %s116
      %119 = dma.hbm_to_vmem [thread:$0]  %s115, 16, %s117, [#allocation15]
    $region37: #{tpu_custom_call.1} parent=1 // pred_fallthru
      _
    // Predicated region
    $region38: #{tpu_custom_call.1} parent=1 // pred_check
      _
    $region39: #{tpu_custom_call.1} parent=1 // pred_check_branch
      %121 = sbr.rel (0) target = $region41
    $region40: #{tpu_custom_call.1} parent=1 // pred_region
      _
    $region41: #{tpu_custom_call.1} parent=1 // pred_fallthru
      _
    // Predicated region
    $region42: #{tpu_custom_call.1} parent=1 // pred_check
      _
    $region43: #{tpu_custom_call.1} parent=1 // pred_check_branch
      %123 = sbr.rel (0) target = $region45
    $region44: #{tpu_custom_call.1} parent=1 // pred_region
      _
    $region45: #{tpu_custom_call.1} parent=1 // pred_fallthru
      _
    // Predicated region
    $region46: #{tpu_custom_call.1} parent=1 // pred_check
      _
    $region47: #{tpu_custom_call.1} parent=1 // pred_check_branch
      %125 = sbr.rel (0) target = $region49
    $region48: #{tpu_custom_call.1} parent=1 // pred_region
      %127 = dma.done [#allocation3], 1024
    $region49: #{tpu_custom_call.1} parent=1 // pred_fallthru
      _
    // Predicated region
    $region50: #{tpu_custom_call.1} parent=1 // pred_check
      _
    $region51: #{tpu_custom_call.1} parent=1 // pred_check_branch
      %129 = sbr.rel (0) target = $region53
    $region52: #{tpu_custom_call.1} parent=1 // pred_region
      %131 = dma.done [#allocation6], 16
    $region53: #{tpu_custom_call.1} parent=1 // pred_fallthru
      _
    // Predicated region
    $region54: #{tpu_custom_call.1} parent=1 // pred_check
      _
    $region55: #{tpu_custom_call.1} parent=1 // pred_check_branch
      %133 = sbr.rel (0) target = $region57
    $region56: #{tpu_custom_call.1} parent=1 // pred_region
      %135 = dma.done [#allocation6], 2048
    $region57: #{tpu_custom_call.1} parent=1 // pred_fallthru
      _
    // Predicated region
    $region58: #{tpu_custom_call.1} parent=1 // pred_check
      _
    $region59: #{tpu_custom_call.1} parent=1 // pred_check_branch
      %137 = sbr.rel (0) target = $region61
    $region60: #{tpu_custom_call.1} parent=1 // pred_region
      %139 = dma.done [#allocation9], 16
    $region61: #{tpu_custom_call.1} parent=1 // pred_fallthru
      _
    // Predicated region
    $region62: #{tpu_custom_call.1} parent=1 // pred_check
      _
    $region63: #{tpu_custom_call.1} parent=1 // pred_check_branch
      %141 = sbr.rel (0) target = $region65
    $region64: #{tpu_custom_call.1} parent=1 // pred_region
      %143 = dma.done [#allocation9], 2048
    $region65: #{tpu_custom_call.1} parent=1 // pred_fallthru
      _
    // Predicated region
    $region66: #{tpu_custom_call.1} parent=1 // pred_check
      _
    $region67: #{tpu_custom_call.1} parent=1 // pred_check_branch
      %145 = sbr.rel (0) target = $region69
    $region68: #{tpu_custom_call.1} parent=1 // pred_region
      %147 = dma.done [#allocation12], 16
    $region69: #{tpu_custom_call.1} parent=1 // pred_fallthru
      _
    // Predicated region
    $region70: #{tpu_custom_call.1} parent=1 // pred_check
      _
    $region71: #{tpu_custom_call.1} parent=1 // pred_check_branch
      %149 = sbr.rel (0) target = $region73
    $region72: #{tpu_custom_call.1} parent=1 // pred_region
      %151 = dma.done [#allocation12], 2048
    $region73: #{tpu_custom_call.1} parent=1 // pred_fallthru
      _
    // Predicated region
    $region74: #{tpu_custom_call.1} parent=1 // pred_check
      _
    $region75: #{tpu_custom_call.1} parent=1 // pred_check_branch
      %153 = sbr.rel (0) target = $region77
    $region76: #{tpu_custom_call.1} parent=1 // pred_region
      %155 = dma.done [#allocation15], 16
    $region77: #{tpu_custom_call.1} parent=1 // pred_fallthru
      _
    %v156 = vld [vmem:[#allocation2] sm:$0xff]
    %v157 = vld [vmem:[#allocation2 + $0x8] sm:$0xff]
    %v158 = vld [vmem:[#allocation2 + $0x10] sm:$0xff]
    %v159 = vld [vmem:[#allocation2 + $0x18] sm:$0xff]
    %v160 = vld [vmem:[#allocation2 + $0x20] sm:$0xff]
    %v161 = vld [vmem:[#allocation2 + $0x28] sm:$0xff]
    %v162 = vld [vmem:[#allocation2 + $0x30] sm:$0xff]
    %v163 = vld [vmem:[#allocation2 + $0x38] sm:$0xff]
    %v164 = vld [vmem:[#allocation7] sm:$0xff]
    %v165 = vld [vmem:[#allocation7 + $0x8] sm:$0xff]
    %v166 = vld [vmem:[#allocation7 + $0x10] sm:$0xff]
    %v167 = vld [vmem:[#allocation7 + $0x18] sm:$0xff]
    %v168 = vld [vmem:[#allocation7 + $0x20] sm:$0xff]
    %v169 = vld [vmem:[#allocation7 + $0x28] sm:$0xff]
    %v170 = vld [vmem:[#allocation7 + $0x30] sm:$0xff]
    %v171 = vld [vmem:[#allocation7 + $0x38] sm:$0xff]
    %v172 = vld [vmem:[#allocation7 + $0x40] sm:$0xff]
    %v173 = vld [vmem:[#allocation7 + $0x48] sm:$0xff]
    %v174 = vld [vmem:[#allocation7 + $0x50] sm:$0xff]
    %v175 = vld [vmem:[#allocation7 + $0x58] sm:$0xff]
    %v176 = vld [vmem:[#allocation7 + $0x60] sm:$0xff]
    %v177 = vld [vmem:[#allocation7 + $0x68] sm:$0xff]
    %v178 = vld [vmem:[#allocation7 + $0x70] sm:$0xff]
    %v179 = vld [vmem:[#allocation7 + $0x78] sm:$0xff]
    %v180 = vld [vmem:[#allocation8] sm:$0x1]
    %v182 = vperm.slane %v180, 0
    %184 = vmatpush.msra.mxu0 %v179
    %185 = vmatpush.msra.mxu0 %v178
    %186 = vmatpush.msra.mxu0 %v177
    %187 = vmatpush.msra.mxu0 %v176
    %188 = vmatpush.msra.mxu0 %v175
    %189 = vmatpush.msra.mxu0 %v174
    %190 = vmatpush.msra.mxu0 %v173
    %191 = vmatpush.msra.mxu0 %v172
    %192 = vmatpush.msra.mxu0 %v171
    %193 = vmatpush.msra.mxu0 %v170
    %194 = vmatpush.msra.mxu0 %v169
    %195 = vmatpush.msra.mxu0 %v168
    %196 = vmatpush.msra.mxu0 %v167
    %197 = vmatpush.msra.mxu0 %v166
    %198 = vmatpush.msra.mxu0 %v165
    %199 = vmatpush.msra.mxu0 %v164
    %200 = vmatmul.f32.gmra.mxu0 %v156
    %v201 = vpop.f32.mrf.mxu0
    %v202 = vadd.f32 %v182, %v201
    %203 = vmatmul.f32.gmra.mxu0 %v157
    %v204 = vpop.f32.mrf.mxu0
    %v205 = vadd.f32 %v182, %v204
    %206 = vmatmul.f32.gmra.mxu0 %v158
    %v207 = vpop.f32.mrf.mxu0
    %v208 = vadd.f32 %v182, %v207
    %209 = vmatmul.f32.gmra.mxu0 %v159
    %v210 = vpop.f32.mrf.mxu0
    %v211 = vadd.f32 %v182, %v210
    %212 = vmatmul.f32.gmra.mxu0 %v160
    %v213 = vpop.f32.mrf.mxu0
    %v214 = vadd.f32 %v182, %v213
    %215 = vmatmul.f32.gmra.mxu0 %v161
    %v216 = vpop.f32.mrf.mxu0
    %v217 = vadd.f32 %v182, %v216
    %218 = vmatmul.f32.gmra.mxu0 %v162
    %v219 = vpop.f32.mrf.mxu0
    %v220 = vadd.f32 %v182, %v219
    %221 = vmatmul.f32.gmra.mxu0 %v163
    %v222 = vpop.f32.mrf.mxu0
    %v223 = vadd.f32 %v182, %v222
    %224 = vdwg.mxu0
    %v225 = vld [vmem:[#allocation10] sm:$0xff]
    %v226 = vld [vmem:[#allocation10 + $0x8] sm:$0xff]
    %v227 = vld [vmem:[#allocation10 + $0x10] sm:$0xff]
    %v228 = vld [vmem:[#allocation10 + $0x18] sm:$0xff]
    %v229 = vld [vmem:[#allocation10 + $0x20] sm:$0xff]
    %v230 = vld [vmem:[#allocation10 + $0x28] sm:$0xff]
    %v231 = vld [vmem:[#allocation10 + $0x30] sm:$0xff]
    %v232 = vld [vmem:[#allocation10 + $0x38] sm:$0xff]
    %v233 = vld [vmem:[#allocation10 + $0x40] sm:$0xff]
    %v234 = vld [vmem:[#allocation10 + $0x48] sm:$0xff]
    %v235 = vld [vmem:[#allocation10 + $0x50] sm:$0xff]
    %v236 = vld [vmem:[#allocation10 + $0x58] sm:$0xff]
    %v237 = vld [vmem:[#allocation10 + $0x60] sm:$0xff]
    %v238 = vld [vmem:[#allocation10 + $0x68] sm:$0xff]
    %v239 = vld [vmem:[#allocation10 + $0x70] sm:$0xff]
    %v240 = vld [vmem:[#allocation10 + $0x78] sm:$0xff]
    %v241 = vld [vmem:[#allocation11] sm:$0x1]
    %v243 = vperm.slane %v241, 0
    %245 = vmatpush.msra.mxu0 %v240
    %246 = vmatpush.msra.mxu0 %v239
    %247 = vmatpush.msra.mxu0 %v238
    %248 = vmatpush.msra.mxu0 %v237
    %249 = vmatpush.msra.mxu0 %v236
    %250 = vmatpush.msra.mxu0 %v235
    %251 = vmatpush.msra.mxu0 %v234
    %252 = vmatpush.msra.mxu0 %v233
    %253 = vmatpush.msra.mxu0 %v232
    %254 = vmatpush.msra.mxu0 %v231
    %255 = vmatpush.msra.mxu0 %v230
    %256 = vmatpush.msra.mxu0 %v229
    %257 = vmatpush.msra.mxu0 %v228
    %258 = vmatpush.msra.mxu0 %v227
    %259 = vmatpush.msra.mxu0 %v226
    %260 = vmatpush.msra.mxu0 %v225
    %261 = vmatmul.f32.gmra.mxu0 %v156
    %v262 = vpop.f32.mrf.mxu0
    %v263 = vadd.f32 %v243, %v262
    %264 = vmatmul.f32.gmra.mxu0 %v157
    %v265 = vpop.f32.mrf.mxu0
    %v266 = vadd.f32 %v243, %v265
    %267 = vmatmul.f32.gmra.mxu0 %v158
    %v268 = vpop.f32.mrf.mxu0
    %v269 = vadd.f32 %v243, %v268
    %270 = vmatmul.f32.gmra.mxu0 %v159
    %v271 = vpop.f32.mrf.mxu0
    %v272 = vadd.f32 %v243, %v271
    %273 = vmatmul.f32.gmra.mxu0 %v160
    %v274 = vpop.f32.mrf.mxu0
    %v275 = vadd.f32 %v243, %v274
    %276 = vmatmul.f32.gmra.mxu0 %v161
    %v277 = vpop.f32.mrf.mxu0
    %v278 = vadd.f32 %v243, %v277
    %279 = vmatmul.f32.gmra.mxu0 %v162
    %v280 = vpop.f32.mrf.mxu0
    %v281 = vadd.f32 %v243, %v280
    %282 = vmatmul.f32.gmra.mxu0 %v163
    %v283 = vpop.f32.mrf.mxu0
    %v284 = vadd.f32 %v243, %v283
    %285 = vdwg.mxu0
    %v286 = vadd.f32 %v156, %v158
    %v287 = vadd.f32 %v286, %v160
    %v288 = vadd.f32 %v287, %v162
    %v289 = vadd.f32 %v157, %v159
    %v290 = vadd.f32 %v289, %v161
    %v291 = vadd.f32 %v290, %v163
    %v292 = vld [vmem:[%s1] sm:$0xff]
    %v293 = vld [vmem:[%s1 + $0x8] sm:$0xff]
    %v294 = vld [vmem:[%s1 + $0x10] sm:$0xff]
    %v295 = vld [vmem:[%s1 + $0x18] sm:$0xff]
    %v296 = vld [vmem:[%s1 + $0x20] sm:$0xff]
    %v297 = vld [vmem:[%s1 + $0x28] sm:$0xff]
    %v298 = vld [vmem:[%s1 + $0x30] sm:$0xff]
    %v299 = vld [vmem:[%s1 + $0x38] sm:$0xff]
    %v300 = vld [vmem:[%s1 + $0x40] sm:$0xff]
    %v301 = vld [vmem:[%s1 + $0x48] sm:$0xff]
    %v302 = vld [vmem:[%s1 + $0x50] sm:$0xff]
    %v303 = vld [vmem:[%s1 + $0x58] sm:$0xff]
    %v304 = vld [vmem:[%s1 + $0x60] sm:$0xff]
    %v305 = vld [vmem:[%s1 + $0x68] sm:$0xff]
    %v306 = vld [vmem:[%s1 + $0x70] sm:$0xff]
    %v307 = vld [vmem:[%s1 + $0x78] sm:$0xff]
    %v308 = vld [vmem:[#allocation5] sm:$0x1]
    %v310 = vperm.slane %v308, 0
    %312 = vmatpush.msra.mxu0 %v307
    %313 = vmatpush.msra.mxu0 %v306
    %314 = vmatpush.msra.mxu0 %v305
    %315 = vmatpush.msra.mxu0 %v304
    %316 = vmatpush.msra.mxu0 %v303
    %317 = vmatpush.msra.mxu0 %v302
    %318 = vmatpush.msra.mxu0 %v301
    %319 = vmatpush.msra.mxu0 %v300
    %320 = vmatpush.msra.mxu0 %v299
    %321 = vmatpush.msra.mxu0 %v298
    %322 = vmatpush.msra.mxu0 %v297
    %323 = vmatpush.msra.mxu0 %v296
    %324 = vmatpush.msra.mxu0 %v295
    %325 = vmatpush.msra.mxu0 %v294
    %326 = vmatpush.msra.mxu0 %v293
    %327 = vmatpush.msra.mxu0 %v292
    %328 = vmatmul.f32.gmra.mxu0 %v288
    %v329 = vpop.f32.mrf.mxu0
    %v330 = vadd.f32 %v310, %v329
    %331 = vmatmul.f32.gmra.mxu0 %v291
    %v332 = vpop.f32.mrf.mxu0
    %v333 = vadd.f32 %v310, %v332
    %334 = vdwg.mxu0
    %v335 = vmul.f32 %v330, %v202
    %v336 = vmul.f32 %v333, %v205
    %v337 = vmul.f32 %v330, %v208
    %v338 = vmul.f32 %v333, %v211
    %v339 = vmul.f32 %v330, %v214
    %v340 = vmul.f32 %v333, %v217
    %v341 = vmul.f32 %v330, %v220
    %v342 = vmul.f32 %v333, %v223
    %v343 = vld [vmem:[%s9] sm:$0xff]
    %v344 = vld [vmem:[%s9 + $0x8] sm:$0xff]
    %v345 = vld [vmem:[%s9 + $0x10] sm:$0xff]
    %v346 = vld [vmem:[%s9 + $0x18] sm:$0xff]
    %v347 = vld [vmem:[%s9 + $0x20] sm:$0xff]
    %v348 = vld [vmem:[%s9 + $0x28] sm:$0xff]
    %v349 = vld [vmem:[%s9 + $0x30] sm:$0xff]
    %v350 = vld [vmem:[%s9 + $0x38] sm:$0xff]
    %v351 = vld [vmem:[%s9 + $0x40] sm:$0xff]
    %v352 = vld [vmem:[%s9 + $0x48] sm:$0xff]
    %v353 = vld [vmem:[%s9 + $0x50] sm:$0xff]
    %v354 = vld [vmem:[%s9 + $0x58] sm:$0xff]
    %v355 = vld [vmem:[%s9 + $0x60] sm:$0xff]
    %v356 = vld [vmem:[%s9 + $0x68] sm:$0xff]
    %v357 = vld [vmem:[%s9 + $0x70] sm:$0xff]
    %v358 = vld [vmem:[%s9 + $0x78] sm:$0xff]
    %359 = vmatpush.msra.mxu0 %v358
    %360 = vmatpush.msra.mxu0 %v357
    %361 = vmatpush.msra.mxu0 %v356
    %362 = vmatpush.msra.mxu0 %v355
    %363 = vmatpush.msra.mxu0 %v354
    %364 = vmatpush.msra.mxu0 %v353
    %365 = vmatpush.msra.mxu0 %v352
    %366 = vmatpush.msra.mxu0 %v351
    %367 = vmatpush.msra.mxu0 %v350
    %368 = vmatpush.msra.mxu0 %v349
    %369 = vmatpush.msra.mxu0 %v348
    %370 = vmatpush.msra.mxu0 %v347
    %371 = vmatpush.msra.mxu0 %v346
    %372 = vmatpush.msra.mxu0 %v345
    %373 = vmatpush.msra.mxu0 %v344
    %374 = vmatpush.msra.mxu0 %v343
    %375 = vmatmul.f32.gmra.mxu0 %v335
    %v376 = vpop.f32.mrf.mxu0
    %v377 = vadd.f32 0.0, %v376
    %378 = vmatmul.f32.gmra.mxu0 %v336
    %v379 = vpop.f32.mrf.mxu0
    %v380 = vadd.f32 0.0, %v379
    %381 = vmatmul.f32.gmra.mxu0 %v337
    %v382 = vpop.f32.mrf.mxu0
    %v383 = vadd.f32 0.0, %v382
    %384 = vmatmul.f32.gmra.mxu0 %v338
    %v385 = vpop.f32.mrf.mxu0
    %v386 = vadd.f32 0.0, %v385
    %387 = vmatmul.f32.gmra.mxu0 %v339
    %v388 = vpop.f32.mrf.mxu0
    %v389 = vadd.f32 0.0, %v388
    %390 = vmatmul.f32.gmra.mxu0 %v340
    %v391 = vpop.f32.mrf.mxu0
    %v392 = vadd.f32 0.0, %v391
    %393 = vmatmul.f32.gmra.mxu0 %v341
    %v394 = vpop.f32.mrf.mxu0
    %v395 = vadd.f32 0.0, %v394
    %396 = vmatmul.f32.gmra.mxu0 %v342
    %v397 = vpop.f32.mrf.mxu0
    %v398 = vadd.f32 0.0, %v397
    %399 = vdwg.mxu0
    %vm400 = vcmask 64512
    %v401 = vsel %vm400, %v377, -inf
    %v402 = vsel %vm400, %v383, -inf
    %v403 = vsel %vm400, %v389, -inf
    %v404 = vmax.f32 %v401, %v403
    %v405 = vsel %vm400, %v395, -inf
    %v406 = vmax.f32 %v402, %v405
    %v407 = vmax.f32 %v404, %v406
    %v408 = vsel %vm400, %v380, -inf
    %v409 = vsel %vm400, %v386, -inf
    %v410 = vsel %vm400, %v392, -inf
    %v411 = vmax.f32 %v408, %v410
    %v412 = vsel %vm400, %v398, -inf
    %v413 = vmax.f32 %v409, %v412
    %v414 = vmax.f32 %v411, %v413
    %v415 = vsub.f32 %v377, %v407
    %v416 = vsub.f32 %v380, %v414
    %v417 = vsub.f32 %v383, %v407
    %v418 = vsub.f32 %v386, %v414
    %v419 = vsub.f32 %v389, %v407
    %v420 = vsub.f32 %v392, %v414
    %v421 = vsub.f32 %v395, %v407
    %v422 = vsub.f32 %v398, %v414
    %v423 = vmul.f32 %v415, 1.442695
    %v424 = vpow.pop %v423
    %v425 = vmul.f32 %v416, 1.442695
    %v426 = vpow.pop %v425
    %v427 = vmul.f32 %v417, 1.442695
    %v428 = vpow.pop %v427
    %v429 = vmul.f32 %v418, 1.442695
    %v430 = vpow.pop %v429
    %v431 = vmul.f32 %v419, 1.442695
    %v432 = vpow.pop %v431
    %v433 = vmul.f32 %v420, 1.442695
    %v434 = vpow.pop %v433
    %v435 = vmul.f32 %v421, 1.442695
    %v436 = vpow.pop %v435
    %v437 = vmul.f32 %v422, 1.442695
    %v438 = vpow.pop %v437
    %v439 = vsel %vm400, %v424, 0.0
    %v440 = vsel %vm400, %v428, 0.0
    %v441 = vadd.f32 %v439, %v440
    %v442 = vsel %vm400, %v432, 0.0
    %v443 = vadd.f32 %v441, %v442
    %v444 = vsel %vm400, %v436, 0.0
    %v445 = vadd.f32 %v443, %v444
    %v446 = vsel %vm400, %v426, 0.0
    %v447 = vsel %vm400, %v430, 0.0
    %v448 = vadd.f32 %v446, %v447
    %v449 = vsel %vm400, %v434, 0.0
    %v450 = vadd.f32 %v448, %v449
    %v451 = vsel %vm400, %v438, 0.0
    %v452 = vadd.f32 %v450, %v451
    %v453 = vrcp.pop %v445
    %v454 = vmul.f32 %v445, %v453
    %v455 = vsub.f32 1.0, %v454
    %v456 = vmul.f32 %v453, %v455
    %v457 = vadd.f32 %v453, %v456
    %vm458 = vweird.f32 %v445
    %vm459 = vweird.f32 %v453
    %vm460 = vmor %vm458, %vm459
    %v461 = vsel %vm460, %v453, %v457
    %v462 = vand.u32 2147483647, %v445
    %vm463 = vcmp.eq.f32.partialorder %v462, 8.507059e+37
    %v464 = vand.u32 %v445, 2147483648
    %v465 = vor.u32 1.1754944e-38, %v464
    %v466 = vsel %vm463, %v465, %v461
    %v467 = vmul.f32 %v424, %v466
    %v468 = vrcp.pop %v452
    %v469 = vmul.f32 %v452, %v468
    %v470 = vsub.f32 1.0, %v469
    %v471 = vmul.f32 %v468, %v470
    %v472 = vadd.f32 %v468, %v471
    %vm473 = vweird.f32 %v452
    %vm474 = vweird.f32 %v468
    %vm475 = vmor %vm473, %vm474
    %v476 = vsel %vm475, %v468, %v472
    %v477 = vand.u32 2147483647, %v452
    %vm478 = vcmp.eq.f32.partialorder %v477, 8.507059e+37
    %v479 = vand.u32 %v452, 2147483648
    %v480 = vor.u32 1.1754944e-38, %v479
    %v481 = vsel %vm478, %v480, %v476
    %v482 = vmul.f32 %v426, %v481
    %v483 = vmul.f32 %v428, %v466
    %v484 = vmul.f32 %v430, %v481
    %v485 = vmul.f32 %v432, %v466
    %v486 = vmul.f32 %v434, %v481
    %v487 = vmul.f32 %v436, %v466
    %v488 = vmul.f32 %v438, %v481
    %v489 = vld [vmem:[%s10] sm:$0xff]
    %v491 = vsel %vm400, %v467, 0
    %v494 = vsel %vm400, %v482, 0
    %v497 = vsel %vm400, %v483, 0
    %v500 = vsel %vm400, %v484, 0
    %v503 = vsel %vm400, %v485, 0
    %v506 = vsel %vm400, %v486, 0
    %v509 = vsel %vm400, %v487, 0
    %v512 = vsel %vm400, %v488, 0
    %514 = vmatpush.msra.mxu0 0.0
    %515 = vmatpush.msra.mxu0 0.0
    %516 = vmatpush.msra.mxu0 0.0
    %517 = vmatpush.msra.mxu0 0.0
    %518 = vmatpush.msra.mxu0 0.0
    %519 = vmatpush.msra.mxu0 0.0
    %520 = vmatpush.msra.mxu0 0.0
    %521 = vmatpush.msra.mxu0 0.0
    %522 = vmatpush.msra.mxu0 0.0
    %523 = vmatpush.msra.mxu0 0.0
    %524 = vmatpush.msra.mxu0 0.0
    %525 = vmatpush.msra.mxu0 0.0
    %526 = vmatpush.msra.mxu0 0.0
    %527 = vmatpush.msra.mxu0 0.0
    %528 = vmatpush.msra.mxu0 0.0
    %529 = vmatpush.msra.mxu0 %v489
    %530 = vmatmul.f32.gmra.mxu0 %v491
    %v531 = vpop.f32.mrf.mxu0
    %v532 = vadd.f32 0.0, %v531
    %533 = vmatmul.f32.gmra.mxu0 %v494
    %v534 = vpop.f32.mrf.mxu0
    %v535 = vadd.f32 0.0, %v534
    %536 = vmatmul.f32.gmra.mxu0 %v497
    %v537 = vpop.f32.mrf.mxu0
    %v538 = vadd.f32 0.0, %v537
    %539 = vmatmul.f32.gmra.mxu0 %v500
    %v540 = vpop.f32.mrf.mxu0
    %v541 = vadd.f32 0.0, %v540
    %542 = vmatmul.f32.gmra.mxu0 %v503
    %v543 = vpop.f32.mrf.mxu0
    %v544 = vadd.f32 0.0, %v543
    %545 = vmatmul.f32.gmra.mxu0 %v506
    %v546 = vpop.f32.mrf.mxu0
    %v547 = vadd.f32 0.0, %v546
    %548 = vmatmul.f32.gmra.mxu0 %v509
    %v549 = vpop.f32.mrf.mxu0
    %v550 = vadd.f32 0.0, %v549
    %551 = vmatmul.f32.gmra.mxu0 %v512
    %v552 = vpop.f32.mrf.mxu0
    %v553 = vadd.f32 0.0, %v552
    %554 = vdwg.mxu0
    %v555 = vmul.f32 %v532, %v263
    %v556 = vmul.f32 %v535, %v266
    %v557 = vmul.f32 %v538, %v269
    %v558 = vmul.f32 %v541, %v272
    %v559 = vmul.f32 %v544, %v275
    %v560 = vmul.f32 %v547, %v278
    %v561 = vmul.f32 %v550, %v281
    %v562 = vmul.f32 %v553, %v284
    %v563 = vadd.f32 %v555, %v557
    %v564 = vadd.f32 %v563, %v559
    %v565 = vadd.f32 %v564, %v561
    %v566 = vadd.f32 %v556, %v558
    %v567 = vadd.f32 %v566, %v560
    %v568 = vadd.f32 %v567, %v562
    %v569 = vld [vmem:[#allocation13] sm:$0xff]
    %v570 = vld [vmem:[#allocation13 + $0x8] sm:$0xff]
    %v571 = vld [vmem:[#allocation13 + $0x10] sm:$0xff]
    %v572 = vld [vmem:[#allocation13 + $0x18] sm:$0xff]
    %v573 = vld [vmem:[#allocation13 + $0x20] sm:$0xff]
    %v574 = vld [vmem:[#allocation13 + $0x28] sm:$0xff]
    %v575 = vld [vmem:[#allocation13 + $0x30] sm:$0xff]
    %v576 = vld [vmem:[#allocation13 + $0x38] sm:$0xff]
    %v577 = vld [vmem:[#allocation13 + $0x40] sm:$0xff]
    %v578 = vld [vmem:[#allocation13 + $0x48] sm:$0xff]
    %v579 = vld [vmem:[#allocation13 + $0x50] sm:$0xff]
    %v580 = vld [vmem:[#allocation13 + $0x58] sm:$0xff]
    %v581 = vld [vmem:[#allocation13 + $0x60] sm:$0xff]
    %v582 = vld [vmem:[#allocation13 + $0x68] sm:$0xff]
    %v583 = vld [vmem:[#allocation13 + $0x70] sm:$0xff]
    %v584 = vld [vmem:[#allocation13 + $0x78] sm:$0xff]
    %v585 = vld [vmem:[#allocation14] sm:$0x1]
    %v587 = vperm.slane %v585, 0
    %589 = vmatpush.msra.mxu0 %v584
    %590 = vmatpush.msra.mxu0 %v583
    %591 = vmatpush.msra.mxu0 %v582
    %592 = vmatpush.msra.mxu0 %v581
    %593 = vmatpush.msra.mxu0 %v580
    %594 = vmatpush.msra.mxu0 %v579
    %595 = vmatpush.msra.mxu0 %v578
    %596 = vmatpush.msra.mxu0 %v577
    %597 = vmatpush.msra.mxu0 %v576
    %598 = vmatpush.msra.mxu0 %v575
    %599 = vmatpush.msra.mxu0 %v574
    %600 = vmatpush.msra.mxu0 %v573
    %601 = vmatpush.msra.mxu0 %v572
    %602 = vmatpush.msra.mxu0 %v571
    %603 = vmatpush.msra.mxu0 %v570
    %604 = vmatpush.msra.mxu0 %v569
    %605 = vmatmul.f32.gmra.mxu0 %v565
    %v606 = vpop.f32.mrf.mxu0
    %v607 = vadd.f32 %v587, %v606
    %608 = vmatmul.f32.gmra.mxu0 %v568
    %v609 = vpop.f32.mrf.mxu0
    %v610 = vadd.f32 %v587, %v609
    %611 = vdwg.mxu0
    %612 = vst [vmem:[#allocation16] sm:$0xff] %v607
    %613 = vst [vmem:[#allocation16 + $0x8] sm:$0xff] %v610
    // Predicated region
    $region78: #{tpu_custom_call.1} parent=1 // pred_check
      _
    $region79: #{tpu_custom_call.1} parent=1 // pred_check_branch
      %615 = sbr.rel (0) target = $region81
    $region80: #{tpu_custom_call.1} parent=1 // pred_region
      %617 = vsyncadd [#allocation4], 0
      %s618 = sshll.u32 [#allocation16], 4
      %s619 = int_to_ptr.vmem [resolvable:$true] %s618
      %s620 = sshll.u32 %s11, 4
      %s621 = int_to_ptr.hbm [resolvable:$true] %s620
      %626 = dma.vmem_to_hbm [thread:$0]  %s619, 256, %s621, [#allocation4], 128, 128, 8
    $region81: #{tpu_custom_call.1} parent=1 // pred_fallthru
      _
    // Predicated region
    $region82: #{tpu_custom_call.1} parent=1 // pred_check
      _
    $region83: #{tpu_custom_call.1} parent=1 // pred_check_branch
      %628 = sbr.rel (0) target = $region85
    $region84: #{tpu_custom_call.1} parent=1 // pred_region
      %630 = dma.done [#allocation4], 256
    $region85: #{tpu_custom_call.1} parent=1 // pred_fallthru
      _
    %631 = vsyncpa [#allocation3], 1
    %632 = vsyncpa [#allocation6], 1
    %633 = vsyncpa [#allocation9], 1
    %634 = vsyncpa [#allocation12], 1
    %635 = vsyncpa [#allocation15], 1
    %636 = vsyncpa [#allocation4], 1

</llo_original>
